<compile_context>
chip_gen: v6e
topology: v6e:2x2x1
jax: 0.10.0
libtpu: 0.0.40
codegen_flags: <defaults>
</compile_context>

<pallas_src>
import jax
import jax.numpy as jnp
from jax import lax
from jax.experimental import pallas as pl
from jax.experimental.pallas import tpu as pltpu

INPUT_SIZE = 512
H1 = 256
H2 = 128
NUM_CLASSES = 1


def _round_up(x, m):
    return ((x + m - 1) // m) * m


def _disc_kernel(h_ref, w1_ref, b1_ref, w2_ref, b2_ref, w3_ref, b3_ref, o_ref):
    # h tile arrives as bf16 (HBM byte stream already halved upstream).
    x = h_ref[...]

    # Linear 1 (512 -> 256) + LeakyReLU(0.2); f32 accumulation, f32 elementwise
    # (v5e VPU/EUP has no bf16 path, so elementwise stays f32 everywhere).
    z1 = jnp.dot(x, w1_ref[...], preferred_element_type=jnp.float32) + b1_ref[...]
    a1 = jnp.where(z1 >= 0, z1, 0.2 * z1)

    # Linear 2 (256 -> 128) + LeakyReLU(0.2).
    z2 = jnp.dot(a1.astype(jnp.bfloat16), w2_ref[...],
                 preferred_element_type=jnp.float32) + b2_ref[...]
    a2 = jnp.where(z2 >= 0, z2, 0.2 * z2)

    # Linear 3 (128 -> 1), emitted lane-dense as a (1, tb) row:
    #   out[0, j] = sum_k w3[0, k] * a2[j, k]
    # dot_general with both contracting dims last (same pattern as q @ k^T in
    # flash attention) -> (1, tb) straight off the MXU, so the output store is
    # an unmasked, lane-dense vst instead of a last-dim-1 masked store.
    z3 = lax.dot_general(w3_ref[...], a2, (((1,), (1,)), ((), ())),
                         preferred_element_type=jnp.float32) + b3_ref[...]

    o_ref[...] = jax.nn.sigmoid(z3)[None]            # (1, 1, tb)


def language_discriminator(h, params, *, tb=512, single_block_rows=1024):
    """h: (B, 512) activations (ideally bf16) -> (B, 1) float32 probabilities."""
    w1, b1, w2, b2, w3, b3 = params

    B = h.shape[0]
    if B == 0:
        return jnp.zeros((0, NUM_CLASSES), jnp.float32)

    # Ideally the upstream projection head emits bf16 directly (as in the demo);
    # this cast is only a fallback for f32 callers.
    # TODO(synk): fuse this discriminator into the producing projection-head
    # kernel so `h` never round-trips through HBM at all.
    if h.dtype != jnp.bfloat16:
        h = h.astype(jnp.bfloat16)

    # Kernel-side parameter layout: bf16 MXU weights, f32 biases, (1,128) f32
    # row for the final weight, (1,1) f32 final bias.
    w1k = w1.astype(jnp.bfloat16)
    w2k = w2.astype(jnp.bfloat16)
    b1k = jnp.reshape(b1, (1, H1)).astype(jnp.float32)
    b2k = jnp.reshape(b2, (1, H2)).astype(jnp.float32)
    w3k = jnp.reshape(w3, (1, H2)).astype(jnp.float32)
    b3k = jnp.reshape(b3, (1, NUM_CLASSES)).astype(jnp.float32)

    # Tile selection:
    #  * B <= single_block_rows: ONE grid step (8-aligned whole batch) -- no
    #    per-step overhead, weights DMA'd exactly once (best on 1-TC v5e/v6e).
    #  * larger B: 128-aligned tb (default 512) tiles -> >= 2 "parallel" grid
    #    steps so v7x's two TensorCores (and both HBM streams) get work.
    if B <= single_block_rows:
        tb_eff = max(8, _round_up(B, 8))
    else:
        tb_eff = tb
    B_pad = _round_up(B, tb_eff)
    if B_pad != B:
        h = jnp.pad(h, ((0, B_pad - B), (0, 0)))
    num_tiles = B_pad // tb_eff

    cost = pl.CostEstimate(
        flops=2 * B_pad * (INPUT_SIZE * H1 + H1 * H2 + H2 * NUM_CLASSES),
        transcendentals=2 * B_pad,                      # sigmoid ~ exp + recip
        bytes_accessed=(B_pad * INPUT_SIZE * 2          # bf16 activations
                        + B_pad * 4                     # f32 outputs
                        + (INPUT_SIZE * H1 + H1 * H2) * 2   # bf16 weights
                        + (H1 + H2 + H2 + NUM_CLASSES) * 4),
    )

    out = pl.pallas_call(
        _disc_kernel,
        out_shape=jax.ShapeDtypeStruct((num_tiles, 1, tb_eff), jnp.float32),
        grid_spec=pltpu.PrefetchScalarGridSpec(
            num_scalar_prefetch=0,
            grid=(num_tiles,),
            in_specs=[
                # TODO(synk): bump this h spec to pipeline_mode=pl.Buffered(3)
                # if profiling shows exposed DMA gaps on long grids.
                pl.BlockSpec((tb_eff, INPUT_SIZE), lambda i: (i, 0)),   # h (bf16)
                pl.BlockSpec((INPUT_SIZE, H1), lambda i: (0, 0)),       # w1 (bf16)
                pl.BlockSpec((1, H1), lambda i: (0, 0)),                # b1
                pl.BlockSpec((H1, H2), lambda i: (0, 0)),               # w2 (bf16)
                pl.BlockSpec((1, H2), lambda i: (0, 0)),                # b2
                pl.BlockSpec((1, H2), lambda i: (0, 0)),                # w3 row
                pl.BlockSpec((1, NUM_CLASSES), lambda i: (0, 0)),       # b3
            ],
            out_specs=pl.BlockSpec((1, 1, tb_eff), lambda i: (i, 0, 0)),  # lane-dense
        ),
        compiler_params=pltpu.CompilerParams(
            dimension_semantics=("parallel",),
            vmem_limit_bytes=16 * 1024 * 1024,
        ),
        cost_estimate=cost,
    )(h, w1k, b1k, w2k, b2k, w3k, b3k)

    # (num_tiles, 1, tb_eff) lane-dense slab -> (B, 1) probability column.
    return out.reshape(-1)[:B].reshape(B, NUM_CLASSES)


def init_params(key):
    """Deterministic synthetic f32 parameters (torch.nn.Linear-like uniform init)."""
    ks = jax.random.split(key, 6)

    def linear(kw, kb, fan_in, fan_out):
        bound = 1.0 / jnp.sqrt(fan_in)
        w = jax.random.uniform(kw, (fan_in, fan_out), jnp.float32, -bound, bound)
        b = jax.random.uniform(kb, (1, fan_out), jnp.float32, -bound, bound)
        return w, b

    w1, b1 = linear(ks[0], ks[1], INPUT_SIZE, H1)
    w2, b2 = linear(ks[2], ks[3], H1, H2)
    w3, b3 = linear(ks[4], ks[5], H2, NUM_CLASSES)
    return (w1, b1, w2, b2, w3, b3)


def reference(h, params):
    """Pure-JAX f32 reference matching the PyTorch module semantics."""
    w1, b1, w2, b2, w3, b3 = params
    z1 = h @ w1 + b1
    a1 = jnp.where(z1 >= 0, z1, 0.2 * z1)
    z2 = a1 @ w2 + b2
    a2 = jnp.where(z2 >= 0, z2, 0.2 * z2)
    return jax.nn.sigmoid(a2 @ w3 + b3)


if __name__ == "__main__":
    key = jax.random.PRNGKey(0)
    k_h, k_p = jax.random.split(key)

    B = 256  # small demo batch -> one grid step, whole batch resident in VMEM
    # Emulate the upstream projection head emitting bf16 activations.
    h = jax.random.normal(k_h, (B, INPUT_SIZE), jnp.float32).astype(jnp.bfloat16)
    params = init_params(k_p)

    out = language_discriminator(h, params)
    out = jax.block_until_ready(out)

    ref = reference(h.astype(jnp.float32), params)
    assert out.shape == (B, NUM_CLASSES)
    # bf16 activations/weights on the MXU => looser tolerance vs f32 reference.
    max_err = float(jnp.max(jnp.abs(out - ref)))
    assert max_err < 2e-2, f"mismatch vs reference: max abs err {max_err}"

    print("KERNEL_OK")
</pallas_src>

<mosaic_0001>
module attributes {stable_mosaic.version = 11 : i64} {
  func.func @_disc_kernel(%arg0: i32, %arg1: memref<256x512xbf16, #tpu.memory_space<vmem>>, %arg2: memref<512x256xbf16, #tpu.memory_space<vmem>>, %arg3: memref<1x256xf32, #tpu.memory_space<vmem>>, %arg4: memref<256x128xbf16, #tpu.memory_space<vmem>>, %arg5: memref<1x128xf32, #tpu.memory_space<vmem>>, %arg6: memref<1x128xf32, #tpu.memory_space<vmem>>, %arg7: memref<1x1xf32, #tpu.memory_space<vmem>>, %arg8: memref<1x1x256xf32, #tpu.memory_space<vmem>>) attributes {dimension_semantics = [#tpu.dimension_semantics<parallel>], iteration_bounds = array<i64: 1>, scalar_prefetch = 0 : i64, scratch_operands = 0 : i64, tpu.core_type = #tpu.core_type<tc>, window_params = [{transform_indices = @transform_0, window_bounds = array<i64: 256, 512>}, {pipeline_mode = #tpu.pipeline_mode<synchronous>, transform_indices = @transform_1, window_bounds = array<i64: 512, 256>}, {pipeline_mode = #tpu.pipeline_mode<synchronous>, transform_indices = @transform_2, window_bounds = array<i64: 1, 256>}, {pipeline_mode = #tpu.pipeline_mode<synchronous>, transform_indices = @transform_3, window_bounds = array<i64: 256, 128>}, {pipeline_mode = #tpu.pipeline_mode<synchronous>, transform_indices = @transform_4, window_bounds = array<i64: 1, 128>}, {pipeline_mode = #tpu.pipeline_mode<synchronous>, transform_indices = @transform_5, window_bounds = array<i64: 1, 128>}, {pipeline_mode = #tpu.pipeline_mode<synchronous>, transform_indices = @transform_6, window_bounds = array<i64: 1, 1>}, {transform_indices = @transform_7, window_bounds = array<i64: 1, 1, 256>}]} {
    %c0 = arith.constant 0 : index
    %c0_0 = arith.constant 0 : index
    %0 = vector.load %arg1[%c0, %c0_0] : memref<256x512xbf16, #tpu.memory_space<vmem>>, vector<256x512xbf16>
    %c0_1 = arith.constant 0 : index
    %c0_2 = arith.constant 0 : index
    %1 = vector.load %arg2[%c0_1, %c0_2] : memref<512x256xbf16, #tpu.memory_space<vmem>>, vector<512x256xbf16>
    %cst = arith.constant dense<0.000000e+00> : vector<256x256xf32>
    %2 = tpu.matmul %0, %1, %cst {dimension_numbers = #tpu.dot_dimension_numbers<[1], [0], [0], [1], [0, 0, 1, 1], [], []>} : vector<256x512xbf16>, vector<512x256xbf16>, vector<256x256xf32> -> vector<256x256xf32>
    %c0_3 = arith.constant 0 : index
    %c0_4 = arith.constant 0 : index
    %3 = vector.load %arg3[%c0_3, %c0_4] : memref<1x256xf32, #tpu.memory_space<vmem>>, vector<1x256xf32>
    %4 = vector.broadcast %3 : vector<1x256xf32> to vector<256x256xf32>
    %5 = arith.addf %2, %4 : vector<256x256xf32>
    %cst_5 = arith.constant 0.000000e+00 : f32
    %6 = vector.broadcast %cst_5 : f32 to vector<256x256xf32>
    %7 = arith.cmpf oge, %5, %6 : vector<256x256xf32>
    %cst_6 = arith.constant 2.000000e-01 : f32
    %8 = vector.broadcast %cst_6 : f32 to vector<256x256xf32>
    %9 = arith.mulf %8, %5 : vector<256x256xf32>
    %10 = arith.select %7, %5, %9 : vector<256x256xi1>, vector<256x256xf32>
    %11 = arith.truncf %10 : vector<256x256xf32> to vector<256x256xbf16>
    %c0_7 = arith.constant 0 : index
    %c0_8 = arith.constant 0 : index
    %12 = vector.load %arg4[%c0_7, %c0_8] : memref<256x128xbf16, #tpu.memory_space<vmem>>, vector<256x128xbf16>
    %cst_9 = arith.constant dense<0.000000e+00> : vector<256x128xf32>
    %13 = tpu.matmul %11, %12, %cst_9 {dimension_numbers = #tpu.dot_dimension_numbers<[1], [0], [0], [1], [0, 0, 1, 1], [], []>} : vector<256x256xbf16>, vector<256x128xbf16>, vector<256x128xf32> -> vector<256x128xf32>
    %c0_10 = arith.constant 0 : index
    %c0_11 = arith.constant 0 : index
    %14 = vector.load %arg5[%c0_10, %c0_11] : memref<1x128xf32, #tpu.memory_space<vmem>>, vector<1x128xf32>
    %15 = vector.broadcast %14 : vector<1x128xf32> to vector<256x128xf32>
    %16 = arith.addf %13, %15 : vector<256x128xf32>
    %cst_12 = arith.constant 0.000000e+00 : f32
    %17 = vector.broadcast %cst_12 : f32 to vector<256x128xf32>
    %18 = arith.cmpf oge, %16, %17 : vector<256x128xf32>
    %cst_13 = arith.constant 2.000000e-01 : f32
    %19 = vector.broadcast %cst_13 : f32 to vector<256x128xf32>
    %20 = arith.mulf %19, %16 : vector<256x128xf32>
    %21 = arith.select %18, %16, %20 : vector<256x128xi1>, vector<256x128xf32>
    %c0_14 = arith.constant 0 : index
    %c0_15 = arith.constant 0 : index
    %22 = vector.load %arg6[%c0_14, %c0_15] : memref<1x128xf32, #tpu.memory_space<vmem>>, vector<1x128xf32>
    %cst_16 = arith.constant dense<0.000000e+00> : vector<1x256xf32>
    %23 = tpu.matmul %22, %21, %cst_16 {dimension_numbers = #tpu.dot_dimension_numbers<[1], [1], [0], [0], [0, 0, 1, 0], [], []>} : vector<1x128xf32>, vector<256x128xf32>, vector<1x256xf32> -> vector<1x256xf32>
    %c0_17 = arith.constant 0 : index
    %c0_18 = arith.constant 0 : index
    %24 = vector.load %arg7[%c0_17, %c0_18] : memref<1x1xf32, #tpu.memory_space<vmem>>, vector<1x1xf32>
    %25 = vector.broadcast %24 : vector<1x1xf32> to vector<1x256xf32>
    %26 = arith.addf %23, %25 : vector<1x256xf32>
    %27 = arith.negf %26 : vector<1x256xf32>
    %28 = math.exp %27 : vector<1x256xf32>
    %cst_19 = arith.constant 1.000000e+00 : f32
    %29 = vector.broadcast %cst_19 : f32 to vector<1x256xf32>
    %30 = arith.addf %29, %28 : vector<1x256xf32>
    %31 = arith.divf %29, %30 : vector<1x256xf32>
    %32 = vector.shape_cast %31 : vector<1x256xf32> to vector<1x1x256xf32>
    %c0_20 = arith.constant 0 : index
    %c0_21 = arith.constant 0 : index
    %c0_22 = arith.constant 0 : index
    %33 = vector.load %arg8[%c0_20, %c0_21, %c0_22] : memref<1x1x256xf32, #tpu.memory_space<vmem>>, vector<1x1x256xf32>
    tpu.vector_store %arg8[%c0_20, %c0_21, %c0_22], %32 {strides = array<i32>} : memref<1x1x256xf32, #tpu.memory_space<vmem>>, vector<1x1x256xf32>,
    return
  }
  func.func @transform_0(%arg0: i32) -> (i32, i32) {
    %c0_i32 = arith.constant 0 : i32
    %c0_i32_0 = arith.constant 0 : i32
    return %arg0, %c0_i32 : i32, i32
  }
  func.func @transform_1(%arg0: i32) -> (i32, i32) {
    %c0_i32 = arith.constant 0 : i32
    %c0_i32_0 = arith.constant 0 : i32
    %c0_i32_1 = arith.constant 0 : i32
    return %c0_i32, %c0_i32_0 : i32, i32
  }
  func.func @transform_2(%arg0: i32) -> (i32, i32) {
    %c0_i32 = arith.constant 0 : i32
    %c0_i32_0 = arith.constant 0 : i32
    %c0_i32_1 = arith.constant 0 : i32
    return %c0_i32, %c0_i32_0 : i32, i32
  }
  func.func @transform_3(%arg0: i32) -> (i32, i32) {
    %c0_i32 = arith.constant 0 : i32
    %c0_i32_0 = arith.constant 0 : i32
    %c0_i32_1 = arith.constant 0 : i32
    return %c0_i32, %c0_i32_0 : i32, i32
  }
  func.func @transform_4(%arg0: i32) -> (i32, i32) {
    %c0_i32 = arith.constant 0 : i32
    %c0_i32_0 = arith.constant 0 : i32
    %c0_i32_1 = arith.constant 0 : i32
    return %c0_i32, %c0_i32_0 : i32, i32
  }
  func.func @transform_5(%arg0: i32) -> (i32, i32) {
    %c0_i32 = arith.constant 0 : i32
    %c0_i32_0 = arith.constant 0 : i32
    %c0_i32_1 = arith.constant 0 : i32
    return %c0_i32, %c0_i32_0 : i32, i32
  }
  func.func @transform_6(%arg0: i32) -> (i32, i32) {
    %c0_i32 = arith.constant 0 : i32
    %c0_i32_0 = arith.constant 0 : i32
    %c0_i32_1 = arith.constant 0 : i32
    return %c0_i32, %c0_i32_0 : i32, i32
  }
  func.func @transform_7(%arg0: i32) -> (i32, i32, i32) {
    %c0_i32 = arith.constant 0 : i32
    %c0_i32_0 = arith.constant 0 : i32
    %c0_i32_1 = arith.constant 0 : i32
    return %arg0, %c0_i32, %c0_i32_0 : i32, i32, i32
  }
}

</mosaic_0001>

<llo_original>
// kernel: tpu_custom_call.1
$region0: #{tpu_custom_call.1}
  #allocation0 [shape = 'u32[]', space=smem, size = 0x4, offset = 0x4, fixed_abs, tag = 'smem constant byte address 0x4 - core index']
  #allocation1 [shape = 'u32[144,128]{1,0:T(1,128)}', space=vmem, size = 0x12000, scoped, tag = 'internal scratch']
  #allocation2 [shape = 'f32[1,1]{1,0:T(1,128)S(1)}', space=vmem, size = 0x200, scoped, tag = 'scoped memory for tpu_custom_call.1']
  %s0 = inlined_call_operand.hbm [shape: bf16[256,512], index: 0, kind: input, shape index: {}]
  %s1 = inlined_call_operand.hbm [shape: bf16[512,256], index: 1, kind: input, shape index: {}]
  %s2 = inlined_call_operand.vmem [shape: f32[1,256], index: 2, kind: input, shape index: {}]
  %s3 = inlined_call_operand.hbm [shape: bf16[256,128], index: 3, kind: input, shape index: {}]
  %s4 = inlined_call_operand.vmem [shape: f32[1,128], index: 4, kind: input, shape index: {}]
  %s5 = inlined_call_operand.vmem [shape: f32[1,128], index: 5, kind: input, shape index: {}]
  %s6 = inlined_call_operand.<no memory space> [shape: f32[1,1], index: 6, kind: input, shape index: {}]
  %s7 = inlined_call_operand.hbm [shape: f32[1,1,256], index: 7, kind: output, shape index: {}]
  %s8 = sld [smem:[#allocation0]]
  $region50: #{tpu_custom_call.1} parent=0
    _
  %s10 = ssub.s32 1, %s8
  %s11 = scalar_select 0, %s10, %s8
  %v12 = vstv %s6
  %13 = vst [vmem:[#allocation2] sm:$0x1] %v12
  $region1: #{tpu_custom_call.1} parent=0
    #allocation3 [shape = 'u8[262144]{0}', space=vmem, size = 0x40000, scoped, tag = 'input window, operand 0, single buffered']
    #allocation4 [shape = 's32[1]{0}', space=sflag, size = 0x4, scoped, tag = 'scoped memory for tpu_custom_call.1']
    #allocation5 [shape = 's32[1]{0}', space=sflag, size = 0x4, scoped, tag = 'scoped memory for tpu_custom_call.1']
    #allocation6 [shape = 'u8[262144]{0}', space=vmem, size = 0x40000, scoped, tag = 'input window, operand 1, single buffered']
    #allocation7 [shape = 's32[1]{0}', space=sflag, size = 0x4, scoped, tag = 'scoped memory for tpu_custom_call.1']
    #allocation8 [shape = 'u8[65536]{0}', space=vmem, size = 0x10000, scoped, tag = 'input window, operand 3, single buffered']
    #allocation9 [shape = 'u8[1024]{0}', space=vmem, size = 0x400, scoped, tag = 'output window, operand 0, single buffered']
    %14 = vsyncpa [#allocation4], 0
    %15 = vsyncpa [#allocation7], 0
    %16 = vsyncpa [#allocation5], 0
    // Predicated region
    $region2: #{tpu_custom_call.1} parent=1 // pred_check
      _
    $region3: #{tpu_custom_call.1} parent=1 // pred_check_branch
      %18 = sbr.rel (0) target = $region5
    $region4: #{tpu_custom_call.1} parent=1 // pred_region
      %s20 = ssub.s32 8192, 8192
      %21 = vsyncadd [#allocation4], %s20
      %s22 = sshll.u32 [#allocation3], 4
      %s23 = int_to_ptr.vmem [resolvable:$true] %s22
      %28 = dma.hbm_to_vmem [thread:$0]  %s0, 8192, %s23, [#allocation4], 256, 256, 16
    $region5: #{tpu_custom_call.1} parent=1 // pred_fallthru
      _
    // Predicated region
    $region6: #{tpu_custom_call.1} parent=1 // pred_check
      _
    $region7: #{tpu_custom_call.1} parent=1 // pred_check_branch
      %30 = sbr.rel (0) target = $region9
    $region8: #{tpu_custom_call.1} parent=1 // pred_region
      %s32 = ssub.s32 8192, 8192
      %33 = vsyncadd [#allocation7], %s32
      %s34 = sshll.u32 [#allocation6], 4
      %s35 = int_to_ptr.vmem [resolvable:$true] %s34
      %40 = dma.hbm_to_vmem [thread:$0]  %s1, 8192, %s35, [#allocation7], 128, 128, 8
    $region9: #{tpu_custom_call.1} parent=1 // pred_fallthru
      _
    // Predicated region
    $region10: #{tpu_custom_call.1} parent=1 // pred_check
      _
    $region11: #{tpu_custom_call.1} parent=1 // pred_check_branch
      %42 = sbr.rel (0) target = $region13
    $region12: #{tpu_custom_call.1} parent=1 // pred_region
      _
    $region13: #{tpu_custom_call.1} parent=1 // pred_fallthru
      _
    // Predicated region
    $region14: #{tpu_custom_call.1} parent=1 // pred_check
      _
    $region15: #{tpu_custom_call.1} parent=1 // pred_check_branch
      %44 = sbr.rel (0) target = $region17
    $region16: #{tpu_custom_call.1} parent=1 // pred_region
      %s46 = ssub.s32 2048, 2048
      %47 = vsyncadd [#allocation7], %s46
      %s48 = sshll.u32 [#allocation8], 4
      %s49 = int_to_ptr.vmem [resolvable:$true] %s48
      %54 = dma.hbm_to_vmem [thread:$0]  %s3, 2048, %s49, [#allocation7], 64, 64, 4
    $region17: #{tpu_custom_call.1} parent=1 // pred_fallthru
      _
    // Predicated region
    $region18: #{tpu_custom_call.1} parent=1 // pred_check
      _
    $region19: #{tpu_custom_call.1} parent=1 // pred_check_branch
      %56 = sbr.rel (0) target = $region21
    $region20: #{tpu_custom_call.1} parent=1 // pred_region
      _
    $region21: #{tpu_custom_call.1} parent=1 // pred_fallthru
      _
    // Predicated region
    $region22: #{tpu_custom_call.1} parent=1 // pred_check
      _
    $region23: #{tpu_custom_call.1} parent=1 // pred_check_branch
      %58 = sbr.rel (0) target = $region25
    $region24: #{tpu_custom_call.1} parent=1 // pred_region
      _
    $region25: #{tpu_custom_call.1} parent=1 // pred_fallthru
      _
    // Predicated region
    $region26: #{tpu_custom_call.1} parent=1 // pred_check
      _
    $region27: #{tpu_custom_call.1} parent=1 // pred_check_branch
      %60 = sbr.rel (0) target = $region29
    $region28: #{tpu_custom_call.1} parent=1 // pred_region
      _
    $region29: #{tpu_custom_call.1} parent=1 // pred_fallthru
      _
    // Predicated region
    $region30: #{tpu_custom_call.1} parent=1 // pred_check
      _
    $region31: #{tpu_custom_call.1} parent=1 // pred_check_branch
      %62 = sbr.rel (0) target = $region33
    $region32: #{tpu_custom_call.1} parent=1 // pred_region
      %63 = dma.done [#allocation4], 8192
    $region33: #{tpu_custom_call.1} parent=1 // pred_fallthru
      _
    // Predicated region
    $region34: #{tpu_custom_call.1} parent=1 // pred_check
      _
    $region35: #{tpu_custom_call.1} parent=1 // pred_check_branch
      %65 = sbr.rel (0) target = $region37
    $region36: #{tpu_custom_call.1} parent=1 // pred_region
      %66 = dma.done [#allocation7], 8192
    $region37: #{tpu_custom_call.1} parent=1 // pred_fallthru
      _
    // Predicated region
    $region38: #{tpu_custom_call.1} parent=1 // pred_check
      _
    $region39: #{tpu_custom_call.1} parent=1 // pred_check_branch
      %68 = sbr.rel (0) target = $region41
    $region40: #{tpu_custom_call.1} parent=1 // pred_region
      %69 = dma.done [#allocation7], 2048
    $region41: #{tpu_custom_call.1} parent=1 // pred_fallthru
      _
    %v71 = vld [vmem:[#allocation3] sm:$0xff]
    %v72 = vld [vmem:[#allocation3 + $0x8] sm:$0xff]
    %v73 = vld [vmem:[#allocation3 + $0x10] sm:$0xff]
    %v74 = vld [vmem:[#allocation3 + $0x18] sm:$0xff]
    %v75 = vld [vmem:[#allocation3 + $0x20] sm:$0xff]
    %v76 = vld [vmem:[#allocation3 + $0x28] sm:$0xff]
    %v77 = vld [vmem:[#allocation3 + $0x30] sm:$0xff]
    %v78 = vld [vmem:[#allocation3 + $0x38] sm:$0xff]
    %v79 = vld [vmem:[#allocation3 + $0x40] sm:$0xff]
    %v80 = vld [vmem:[#allocation3 + $0x48] sm:$0xff]
    %v81 = vld [vmem:[#allocation3 + $0x50] sm:$0xff]
    %v82 = vld [vmem:[#allocation3 + $0x58] sm:$0xff]
    %v83 = vld [vmem:[#allocation3 + $0x60] sm:$0xff]
    %v84 = vld [vmem:[#allocation3 + $0x68] sm:$0xff]
    %v85 = vld [vmem:[#allocation3 + $0x70] sm:$0xff]
    %v86 = vld [vmem:[#allocation3 + $0x78] sm:$0xff]
    %v87 = vld [vmem:[#allocation3 + $0x80] sm:$0xff]
    %v88 = vld [vmem:[#allocation3 + $0x88] sm:$0xff]
    %v89 = vld [vmem:[#allocation3 + $0x90] sm:$0xff]
    %v90 = vld [vmem:[#allocation3 + $0x98] sm:$0xff]
    %v91 = vld [vmem:[#allocation3 + $0xa0] sm:$0xff]
    %v92 = vld [vmem:[#allocation3 + $0xa8] sm:$0xff]
    %v93 = vld [vmem:[#allocation3 + $0xb0] sm:$0xff]
    %v94 = vld [vmem:[#allocation3 + $0xb8] sm:$0xff]
    %v95 = vld [vmem:[#allocation3 + $0xc0] sm:$0xff]
    %v96 = vld [vmem:[#allocation3 + $0xc8] sm:$0xff]
    %v97 = vld [vmem:[#allocation3 + $0xd0] sm:$0xff]
    %v98 = vld [vmem:[#allocation3 + $0xd8] sm:$0xff]
    %v99 = vld [vmem:[#allocation3 + $0xe0] sm:$0xff]
    %v100 = vld [vmem:[#allocation3 + $0xe8] sm:$0xff]
    %v101 = vld [vmem:[#allocation3 + $0xf0] sm:$0xff]
    %v102 = vld [vmem:[#allocation3 + $0xf8] sm:$0xff]
    %v103 = vld [vmem:[#allocation3 + $0x100] sm:$0xff]
    %v104 = vld [vmem:[#allocation3 + $0x108] sm:$0xff]
    %v105 = vld [vmem:[#allocation3 + $0x110] sm:$0xff]
    %v106 = vld [vmem:[#allocation3 + $0x118] sm:$0xff]
    %v107 = vld [vmem:[#allocation3 + $0x120] sm:$0xff]
    %v108 = vld [vmem:[#allocation3 + $0x128] sm:$0xff]
    %v109 = vld [vmem:[#allocation3 + $0x130] sm:$0xff]
    %v110 = vld [vmem:[#allocation3 + $0x138] sm:$0xff]
    %v111 = vld [vmem:[#allocation3 + $0x140] sm:$0xff]
    %v112 = vld [vmem:[#allocation3 + $0x148] sm:$0xff]
    %v113 = vld [vmem:[#allocation3 + $0x150] sm:$0xff]
    %v114 = vld [vmem:[#allocation3 + $0x158] sm:$0xff]
    %v115 = vld [vmem:[#allocation3 + $0x160] sm:$0xff]
    %v116 = vld [vmem:[#allocation3 + $0x168] sm:$0xff]
    %v117 = vld [vmem:[#allocation3 + $0x170] sm:$0xff]
    %v118 = vld [vmem:[#allocation3 + $0x178] sm:$0xff]
    %v119 = vld [vmem:[#allocation3 + $0x180] sm:$0xff]
    %v120 = vld [vmem:[#allocation3 + $0x188] sm:$0xff]
    %v121 = vld [vmem:[#allocation3 + $0x190] sm:$0xff]
    %v122 = vld [vmem:[#allocation3 + $0x198] sm:$0xff]
    %v123 = vld [vmem:[#allocation3 + $0x1a0] sm:$0xff]
    %v124 = vld [vmem:[#allocation3 + $0x1a8] sm:$0xff]
    %v125 = vld [vmem:[#allocation3 + $0x1b0] sm:$0xff]
    %v126 = vld [vmem:[#allocation3 + $0x1b8] sm:$0xff]
    %v127 = vld [vmem:[#allocation3 + $0x1c0] sm:$0xff]
    %v128 = vld [vmem:[#allocation3 + $0x1c8] sm:$0xff]
    %v129 = vld [vmem:[#allocation3 + $0x1d0] sm:$0xff]
    %v130 = vld [vmem:[#allocation3 + $0x1d8] sm:$0xff]
    %v131 = vld [vmem:[#allocation3 + $0x1e0] sm:$0xff]
    %v132 = vld [vmem:[#allocation3 + $0x1e8] sm:$0xff]
    %v133 = vld [vmem:[#allocation3 + $0x1f0] sm:$0xff]
    %v134 = vld [vmem:[#allocation3 + $0x1f8] sm:$0xff]
    %v135 = vld [vmem:[#allocation6] sm:$0xff]
    %v136 = vld [vmem:[#allocation6 + $0x8] sm:$0xff]
    %v137 = vld [vmem:[#allocation6 + $0x10] sm:$0xff]
    %v138 = vld [vmem:[#allocation6 + $0x18] sm:$0xff]
    %v139 = vld [vmem:[#allocation6 + $0x20] sm:$0xff]
    %v140 = vld [vmem:[#allocation6 + $0x28] sm:$0xff]
    %v141 = vld [vmem:[#allocation6 + $0x30] sm:$0xff]
    %v142 = vld [vmem:[#allocation6 + $0x38] sm:$0xff]
    %v143 = vld [vmem:[#allocation6 + $0x40] sm:$0xff]
    %v144 = vld [vmem:[#allocation6 + $0x48] sm:$0xff]
    %v145 = vld [vmem:[#allocation6 + $0x50] sm:$0xff]
    %v146 = vld [vmem:[#allocation6 + $0x58] sm:$0xff]
    %v147 = vld [vmem:[#allocation6 + $0x60] sm:$0xff]
    %v148 = vld [vmem:[#allocation6 + $0x68] sm:$0xff]
    %v149 = vld [vmem:[#allocation6 + $0x70] sm:$0xff]
    %v150 = vld [vmem:[#allocation6 + $0x78] sm:$0xff]
    %v151 = vld [vmem:[#allocation6 + $0x80] sm:$0xff]
    %v152 = vld [vmem:[#allocation6 + $0x88] sm:$0xff]
    %v153 = vld [vmem:[#allocation6 + $0x90] sm:$0xff]
    %v154 = vld [vmem:[#allocation6 + $0x98] sm:$0xff]
    %v155 = vld [vmem:[#allocation6 + $0xa0] sm:$0xff]
    %v156 = vld [vmem:[#allocation6 + $0xa8] sm:$0xff]
    %v157 = vld [vmem:[#allocation6 + $0xb0] sm:$0xff]
    %v158 = vld [vmem:[#allocation6 + $0xb8] sm:$0xff]
    %v159 = vld [vmem:[#allocation6 + $0xc0] sm:$0xff]
    %v160 = vld [vmem:[#allocation6 + $0xc8] sm:$0xff]
    %v161 = vld [vmem:[#allocation6 + $0xd0] sm:$0xff]
    %v162 = vld [vmem:[#allocation6 + $0xd8] sm:$0xff]
    %v163 = vld [vmem:[#allocation6 + $0xe0] sm:$0xff]
    %v164 = vld [vmem:[#allocation6 + $0xe8] sm:$0xff]
    %v165 = vld [vmem:[#allocation6 + $0xf0] sm:$0xff]
    %v166 = vld [vmem:[#allocation6 + $0xf8] sm:$0xff]
    %v167 = vld [vmem:[#allocation6 + $0x100] sm:$0xff]
    %v168 = vld [vmem:[#allocation6 + $0x108] sm:$0xff]
    %v169 = vld [vmem:[#allocation6 + $0x110] sm:$0xff]
    %v170 = vld [vmem:[#allocation6 + $0x118] sm:$0xff]
    %v171 = vld [vmem:[#allocation6 + $0x120] sm:$0xff]
    %v172 = vld [vmem:[#allocation6 + $0x128] sm:$0xff]
    %v173 = vld [vmem:[#allocation6 + $0x130] sm:$0xff]
    %v174 = vld [vmem:[#allocation6 + $0x138] sm:$0xff]
    %v175 = vld [vmem:[#allocation6 + $0x140] sm:$0xff]
    %v176 = vld [vmem:[#allocation6 + $0x148] sm:$0xff]
    %v177 = vld [vmem:[#allocation6 + $0x150] sm:$0xff]
    %v178 = vld [vmem:[#allocation6 + $0x158] sm:$0xff]
    %v179 = vld [vmem:[#allocation6 + $0x160] sm:$0xff]
    %v180 = vld [vmem:[#allocation6 + $0x168] sm:$0xff]
    %v181 = vld [vmem:[#allocation6 + $0x170] sm:$0xff]
    %v182 = vld [vmem:[#allocation6 + $0x178] sm:$0xff]
    %v183 = vld [vmem:[#allocation6 + $0x180] sm:$0xff]
    %v184 = vld [vmem:[#allocation6 + $0x188] sm:$0xff]
    %v185 = vld [vmem:[#allocation6 + $0x190] sm:$0xff]
    %v186 = vld [vmem:[#allocation6 + $0x198] sm:$0xff]
    %v187 = vld [vmem:[#allocation6 + $0x1a0] sm:$0xff]
    %v188 = vld [vmem:[#allocation6 + $0x1a8] sm:$0xff]
    %v189 = vld [vmem:[#allocation6 + $0x1b0] sm:$0xff]
    %v190 = vld [vmem:[#allocation6 + $0x1b8] sm:$0xff]
    %v191 = vld [vmem:[#allocation6 + $0x1c0] sm:$0xff]
    %v192 = vld [vmem:[#allocation6 + $0x1c8] sm:$0xff]
    %v193 = vld [vmem:[#allocation6 + $0x1d0] sm:$0xff]
    %v194 = vld [vmem:[#allocation6 + $0x1d8] sm:$0xff]
    %v195 = vld [vmem:[#allocation6 + $0x1e0] sm:$0xff]
    %v196 = vld [vmem:[#allocation6 + $0x1e8] sm:$0xff]
    %v197 = vld [vmem:[#allocation6 + $0x1f0] sm:$0xff]
    %v198 = vld [vmem:[#allocation6 + $0x1f8] sm:$0xff]
    %v199 = vld [vmem:[%s2] sm:$0x3]
    %v201 = vlaneseq
    %v202 = vshrl.u32 %v201, 7
    %v203 = vsub.s32 0, %v202
    %v204 = vrot.slane %v199, %v203
    %v205 = vlaneseq
    %v206 = vshrl.u32 %v205, 7
    %v207 = vsub.s32 1, %v206
    %v208 = vrot.slane %v199, %v207
    %v275 = vunpack.c.l.b16 %v71
    %v276 = vunpack.c.h.b16 %v71
    %v277 = vunpack.c.l.b16 %v72
    %v278 = vunpack.c.h.b16 %v72
    %v279 = vunpack.c.l.b16 %v73
    %v280 = vunpack.c.h.b16 %v73
    %v281 = vunpack.c.l.b16 %v74
    %v282 = vunpack.c.h.b16 %v74
    %v283 = vunpack.c.l.b16 %v75
    %v284 = vunpack.c.h.b16 %v75
    %v285 = vunpack.c.l.b16 %v76
    %v286 = vunpack.c.h.b16 %v76
    %v287 = vunpack.c.l.b16 %v77
    %v288 = vunpack.c.h.b16 %v77
    %v289 = vunpack.c.l.b16 %v78
    %v290 = vunpack.c.h.b16 %v78
    %v291 = vunpack.c.l.b16 %v79
    %v292 = vunpack.c.h.b16 %v79
    %v293 = vunpack.c.l.b16 %v80
    %v294 = vunpack.c.h.b16 %v80
    %v295 = vunpack.c.l.b16 %v81
    %v296 = vunpack.c.h.b16 %v81
    %v297 = vunpack.c.l.b16 %v82
    %v298 = vunpack.c.h.b16 %v82
    %v299 = vunpack.c.l.b16 %v83
    %v300 = vunpack.c.h.b16 %v83
    %v301 = vunpack.c.l.b16 %v84
    %v302 = vunpack.c.h.b16 %v84
    %v303 = vunpack.c.l.b16 %v85
    %v304 = vunpack.c.h.b16 %v85
    %v305 = vunpack.c.l.b16 %v86
    %v306 = vunpack.c.h.b16 %v86
    %v307 = vunpack.c.l.b16 %v87
    %v308 = vunpack.c.h.b16 %v87
    %v309 = vunpack.c.l.b16 %v88
    %v310 = vunpack.c.h.b16 %v88
    %v311 = vunpack.c.l.b16 %v89
    %v312 = vunpack.c.h.b16 %v89
    %v313 = vunpack.c.l.b16 %v90
    %v314 = vunpack.c.h.b16 %v90
    %v315 = vunpack.c.l.b16 %v91
    %v316 = vunpack.c.h.b16 %v91
    %v317 = vunpack.c.l.b16 %v92
    %v318 = vunpack.c.h.b16 %v92
    %v319 = vunpack.c.l.b16 %v93
    %v320 = vunpack.c.h.b16 %v93
    %v321 = vunpack.c.l.b16 %v94
    %v322 = vunpack.c.h.b16 %v94
    %v323 = vunpack.c.l.b16 %v95
    %v324 = vunpack.c.h.b16 %v95
    %v325 = vunpack.c.l.b16 %v96
    %v326 = vunpack.c.h.b16 %v96
    %v327 = vunpack.c.l.b16 %v97
    %v328 = vunpack.c.h.b16 %v97
    %v329 = vunpack.c.l.b16 %v98
    %v330 = vunpack.c.h.b16 %v98
    %v331 = vunpack.c.l.b16 %v99
    %v332 = vunpack.c.h.b16 %v99
    %v333 = vunpack.c.l.b16 %v100
    %v334 = vunpack.c.h.b16 %v100
    %v335 = vunpack.c.l.b16 %v101
    %v336 = vunpack.c.h.b16 %v101
    %v337 = vunpack.c.l.b16 %v102
    %v338 = vunpack.c.h.b16 %v102
    %v339 = vunpack.c.l.b16 %v103
    %v340 = vunpack.c.h.b16 %v103
    %v341 = vunpack.c.l.b16 %v104
    %v342 = vunpack.c.h.b16 %v104
    %v343 = vunpack.c.l.b16 %v105
    %v344 = vunpack.c.h.b16 %v105
    %v345 = vunpack.c.l.b16 %v106
    %v346 = vunpack.c.h.b16 %v106
    %v347 = vunpack.c.l.b16 %v107
    %v348 = vunpack.c.h.b16 %v107
    %v349 = vunpack.c.l.b16 %v108
    %v350 = vunpack.c.h.b16 %v108
    %v351 = vunpack.c.l.b16 %v109
    %v352 = vunpack.c.h.b16 %v109
    %v353 = vunpack.c.l.b16 %v110
    %v354 = vunpack.c.h.b16 %v110
    %v355 = vunpack.c.l.b16 %v111
    %v356 = vunpack.c.h.b16 %v111
    %v357 = vunpack.c.l.b16 %v112
    %v358 = vunpack.c.h.b16 %v112
    %v359 = vunpack.c.l.b16 %v113
    %v360 = vunpack.c.h.b16 %v113
    %v361 = vunpack.c.l.b16 %v114
    %v362 = vunpack.c.h.b16 %v114
    %v363 = vunpack.c.l.b16 %v115
    %v364 = vunpack.c.h.b16 %v115
    %v365 = vunpack.c.l.b16 %v116
    %v366 = vunpack.c.h.b16 %v116
    %v367 = vunpack.c.l.b16 %v117
    %v368 = vunpack.c.h.b16 %v117
    %v369 = vunpack.c.l.b16 %v118
    %v370 = vunpack.c.h.b16 %v118
    %v371 = vunpack.c.l.b16 %v119
    %v372 = vunpack.c.h.b16 %v119
    %v373 = vunpack.c.l.b16 %v120
    %v374 = vunpack.c.h.b16 %v120
    %v375 = vunpack.c.l.b16 %v121
    %v376 = vunpack.c.h.b16 %v121
    %v377 = vunpack.c.l.b16 %v122
    %v378 = vunpack.c.h.b16 %v122
    %v379 = vunpack.c.l.b16 %v123
    %v380 = vunpack.c.h.b16 %v123
    %v381 = vunpack.c.l.b16 %v124
    %v382 = vunpack.c.h.b16 %v124
    %v383 = vunpack.c.l.b16 %v125
    %v384 = vunpack.c.h.b16 %v125
    %v385 = vunpack.c.l.b16 %v126
    %v386 = vunpack.c.h.b16 %v126
    %v387 = vunpack.c.l.b16 %v127
    %v388 = vunpack.c.h.b16 %v127
    %v389 = vunpack.c.l.b16 %v128
    %v390 = vunpack.c.h.b16 %v128
    %v391 = vunpack.c.l.b16 %v129
    %v392 = vunpack.c.h.b16 %v129
    %v393 = vunpack.c.l.b16 %v130
    %v394 = vunpack.c.h.b16 %v130
    %v395 = vunpack.c.l.b16 %v131
    %v396 = vunpack.c.h.b16 %v131
    %v397 = vunpack.c.l.b16 %v132
    %v398 = vunpack.c.h.b16 %v132
    %v399 = vunpack.c.l.b16 %v133
    %v400 = vunpack.c.h.b16 %v133
    %v401 = vunpack.c.l.b16 %v134
    %v402 = vunpack.c.h.b16 %v134
    %v403 = vpack.c.b16 %v279, %v275
    %v404 = vpack.c.b16 %v280, %v276
    %v405 = vpack.c.b16 %v281, %v277
    %v406 = vpack.c.b16 %v282, %v278
    %v407 = vpack.c.b16 %v287, %v283
    %v408 = vpack.c.b16 %v288, %v284
    %v409 = vpack.c.b16 %v289, %v285
    %v410 = vpack.c.b16 %v290, %v286
    %v411 = vpack.c.b16 %v295, %v291
    %v412 = vpack.c.b16 %v296, %v292
    %v413 = vpack.c.b16 %v297, %v293
    %v414 = vpack.c.b16 %v298, %v294
    %v415 = vpack.c.b16 %v303, %v299
    %v416 = vpack.c.b16 %v304, %v300
    %v417 = vpack.c.b16 %v305, %v301
    %v418 = vpack.c.b16 %v306, %v302
    %v419 = vpack.c.b16 %v311, %v307
    %v420 = vpack.c.b16 %v312, %v308
    %v421 = vpack.c.b16 %v313, %v309
    %v422 = vpack.c.b16 %v314, %v310
    %v423 = vpack.c.b16 %v319, %v315
    %v424 = vpack.c.b16 %v320, %v316
    %v425 = vpack.c.b16 %v321, %v317
    %v426 = vpack.c.b16 %v322, %v318
    %v427 = vpack.c.b16 %v327, %v323
    %v428 = vpack.c.b16 %v328, %v324
    %v429 = vpack.c.b16 %v329, %v325
    %v430 = vpack.c.b16 %v330, %v326
    %v431 = vpack.c.b16 %v335, %v331
    %v432 = vpack.c.b16 %v336, %v332
    %v433 = vpack.c.b16 %v337, %v333
    %v434 = vpack.c.b16 %v338, %v334
    %v435 = vpack.c.b16 %v343, %v339
    %v436 = vpack.c.b16 %v344, %v340
    %v437 = vpack.c.b16 %v345, %v341
    %v438 = vpack.c.b16 %v346, %v342
    %v439 = vpack.c.b16 %v351, %v347
    %v440 = vpack.c.b16 %v352, %v348
    %v441 = vpack.c.b16 %v353, %v349
    %v442 = vpack.c.b16 %v354, %v350
    %v443 = vpack.c.b16 %v359, %v355
    %v444 = vpack.c.b16 %v360, %v356
    %v445 = vpack.c.b16 %v361, %v357
    %v446 = vpack.c.b16 %v362, %v358
    %v447 = vpack.c.b16 %v367, %v363
    %v448 = vpack.c.b16 %v368, %v364
    %v449 = vpack.c.b16 %v369, %v365
    %v450 = vpack.c.b16 %v370, %v366
    %v451 = vpack.c.b16 %v375, %v371
    %v452 = vpack.c.b16 %v376, %v372
    %v453 = vpack.c.b16 %v377, %v373
    %v454 = vpack.c.b16 %v378, %v374
    %v455 = vpack.c.b16 %v383, %v379
    %v456 = vpack.c.b16 %v384, %v380
    %v457 = vpack.c.b16 %v385, %v381
    %v458 = vpack.c.b16 %v386, %v382
    %v459 = vpack.c.b16 %v391, %v387
    %v460 = vpack.c.b16 %v392, %v388
    %v461 = vpack.c.b16 %v393, %v389
    %v462 = vpack.c.b16 %v394, %v390
    %v463 = vpack.c.b16 %v399, %v395
    %v464 = vpack.c.b16 %v400, %v396
    %v465 = vpack.c.b16 %v401, %v397
    %v466 = vpack.c.b16 %v402, %v398
    %v595 = vunpack.c.l.b16 %v135
    %v596 = vunpack.c.h.b16 %v135
    %v597 = vunpack.c.l.b16 %v136
    %v598 = vunpack.c.h.b16 %v136
    %v599 = vunpack.c.l.b16 %v137
    %v600 = vunpack.c.h.b16 %v137
    %v601 = vunpack.c.l.b16 %v138
    %v602 = vunpack.c.h.b16 %v138
    %v603 = vunpack.c.l.b16 %v139
    %v604 = vunpack.c.h.b16 %v139
    %v605 = vunpack.c.l.b16 %v140
    %v606 = vunpack.c.h.b16 %v140
    %v607 = vunpack.c.l.b16 %v141
    %v608 = vunpack.c.h.b16 %v141
    %v609 = vunpack.c.l.b16 %v142
    %v610 = vunpack.c.h.b16 %v142
    %v611 = vunpack.c.l.b16 %v143
    %v612 = vunpack.c.h.b16 %v143
    %v613 = vunpack.c.l.b16 %v144
    %v614 = vunpack.c.h.b16 %v144
    %v615 = vunpack.c.l.b16 %v145
    %v616 = vunpack.c.h.b16 %v145
    %v617 = vunpack.c.l.b16 %v146
    %v618 = vunpack.c.h.b16 %v146
    %v619 = vunpack.c.l.b16 %v147
    %v620 = vunpack.c.h.b16 %v147
    %v621 = vunpack.c.l.b16 %v148
    %v622 = vunpack.c.h.b16 %v148
    %v623 = vunpack.c.l.b16 %v149
    %v624 = vunpack.c.h.b16 %v149
    %v625 = vunpack.c.l.b16 %v150
    %v626 = vunpack.c.h.b16 %v150
    %v627 = vunpack.c.l.b16 %v151
    %v628 = vunpack.c.h.b16 %v151
    %v629 = vunpack.c.l.b16 %v152
    %v630 = vunpack.c.h.b16 %v152
    %v631 = vunpack.c.l.b16 %v153
    %v632 = vunpack.c.h.b16 %v153
    %v633 = vunpack.c.l.b16 %v154
    %v634 = vunpack.c.h.b16 %v154
    %v635 = vunpack.c.l.b16 %v155
    %v636 = vunpack.c.h.b16 %v155
    %v637 = vunpack.c.l.b16 %v156
    %v638 = vunpack.c.h.b16 %v156
    %v639 = vunpack.c.l.b16 %v157
    %v640 = vunpack.c.h.b16 %v157
    %v641 = vunpack.c.l.b16 %v158
    %v642 = vunpack.c.h.b16 %v158
    %v643 = vunpack.c.l.b16 %v159
    %v644 = vunpack.c.h.b16 %v159
    %v645 = vunpack.c.l.b16 %v160
    %v646 = vunpack.c.h.b16 %v160
    %v647 = vunpack.c.l.b16 %v161
    %v648 = vunpack.c.h.b16 %v161
    %v649 = vunpack.c.l.b16 %v162
    %v650 = vunpack.c.h.b16 %v162
    %v651 = vunpack.c.l.b16 %v163
    %v652 = vunpack.c.h.b16 %v163
    %v653 = vunpack.c.l.b16 %v164
    %v654 = vunpack.c.h.b16 %v164
    %v655 = vunpack.c.l.b16 %v165
    %v656 = vunpack.c.h.b16 %v165
    %v657 = vunpack.c.l.b16 %v166
    %v658 = vunpack.c.h.b16 %v166
    %v659 = vunpack.c.l.b16 %v167
    %v660 = vunpack.c.h.b16 %v167
    %v661 = vunpack.c.l.b16 %v168
    %v662 = vunpack.c.h.b16 %v168
    %v663 = vunpack.c.l.b16 %v169
    %v664 = vunpack.c.h.b16 %v169
    %v665 = vunpack.c.l.b16 %v170
    %v666 = vunpack.c.h.b16 %v170
    %v667 = vunpack.c.l.b16 %v171
    %v668 = vunpack.c.h.b16 %v171
    %v669 = vunpack.c.l.b16 %v172
    %v670 = vunpack.c.h.b16 %v172
    %v671 = vunpack.c.l.b16 %v173
    %v672 = vunpack.c.h.b16 %v173
    %v673 = vunpack.c.l.b16 %v174
    %v674 = vunpack.c.h.b16 %v174
    %v675 = vunpack.c.l.b16 %v175
    %v676 = vunpack.c.h.b16 %v175
    %v677 = vunpack.c.l.b16 %v176
    %v678 = vunpack.c.h.b16 %v176
    %v679 = vunpack.c.l.b16 %v177
    %v680 = vunpack.c.h.b16 %v177
    %v681 = vunpack.c.l.b16 %v178
    %v682 = vunpack.c.h.b16 %v178
    %v683 = vunpack.c.l.b16 %v179
    %v684 = vunpack.c.h.b16 %v179
    %v685 = vunpack.c.l.b16 %v180
    %v686 = vunpack.c.h.b16 %v180
    %v687 = vunpack.c.l.b16 %v181
    %v688 = vunpack.c.h.b16 %v181
    %v689 = vunpack.c.l.b16 %v182
    %v690 = vunpack.c.h.b16 %v182
    %v691 = vunpack.c.l.b16 %v183
    %v692 = vunpack.c.h.b16 %v183
    %v693 = vunpack.c.l.b16 %v184
    %v694 = vunpack.c.h.b16 %v184
    %v695 = vunpack.c.l.b16 %v185
    %v696 = vunpack.c.h.b16 %v185
    %v697 = vunpack.c.l.b16 %v186
    %v698 = vunpack.c.h.b16 %v186
    %v699 = vunpack.c.l.b16 %v187
    %v700 = vunpack.c.h.b16 %v187
    %v701 = vunpack.c.l.b16 %v188
    %v702 = vunpack.c.h.b16 %v188
    %v703 = vunpack.c.l.b16 %v189
    %v704 = vunpack.c.h.b16 %v189
    %v705 = vunpack.c.l.b16 %v190
    %v706 = vunpack.c.h.b16 %v190
    %v707 = vunpack.c.l.b16 %v191
    %v708 = vunpack.c.h.b16 %v191
    %v709 = vunpack.c.l.b16 %v192
    %v710 = vunpack.c.h.b16 %v192
    %v711 = vunpack.c.l.b16 %v193
    %v712 = vunpack.c.h.b16 %v193
    %v713 = vunpack.c.l.b16 %v194
    %v714 = vunpack.c.h.b16 %v194
    %v715 = vunpack.c.l.b16 %v195
    %v716 = vunpack.c.h.b16 %v195
    %v717 = vunpack.c.l.b16 %v196
    %v718 = vunpack.c.h.b16 %v196
    %v719 = vunpack.c.l.b16 %v197
    %v720 = vunpack.c.h.b16 %v197
    %v721 = vunpack.c.l.b16 %v198
    %v722 = vunpack.c.h.b16 %v198
    %v723 = vpack.c.b16 %v597, %v595
    %v724 = vpack.c.b16 %v598, %v596
    %v725 = vpack.c.b16 %v601, %v599
    %v726 = vpack.c.b16 %v602, %v600
    %v727 = vpack.c.b16 %v605, %v603
    %v728 = vpack.c.b16 %v606, %v604
    %v729 = vpack.c.b16 %v609, %v607
    %v730 = vpack.c.b16 %v610, %v608
    %v731 = vpack.c.b16 %v613, %v611
    %v732 = vpack.c.b16 %v614, %v612
    %v733 = vpack.c.b16 %v617, %v615
    %v734 = vpack.c.b16 %v618, %v616
    %v735 = vpack.c.b16 %v621, %v619
    %v736 = vpack.c.b16 %v622, %v620
    %v737 = vpack.c.b16 %v625, %v623
    %v738 = vpack.c.b16 %v626, %v624
    %v739 = vpack.c.b16 %v629, %v627
    %v740 = vpack.c.b16 %v630, %v628
    %v741 = vpack.c.b16 %v633, %v631
    %v742 = vpack.c.b16 %v634, %v632
    %v743 = vpack.c.b16 %v637, %v635
    %v744 = vpack.c.b16 %v638, %v636
    %v745 = vpack.c.b16 %v641, %v639
    %v746 = vpack.c.b16 %v642, %v640
    %v747 = vpack.c.b16 %v645, %v643
    %v748 = vpack.c.b16 %v646, %v644
    %v749 = vpack.c.b16 %v649, %v647
    %v750 = vpack.c.b16 %v650, %v648
    %v751 = vpack.c.b16 %v653, %v651
    %v752 = vpack.c.b16 %v654, %v652
    %v753 = vpack.c.b16 %v657, %v655
    %v754 = vpack.c.b16 %v658, %v656
    %v755 = vpack.c.b16 %v661, %v659
    %v756 = vpack.c.b16 %v662, %v660
    %v757 = vpack.c.b16 %v665, %v663
    %v758 = vpack.c.b16 %v666, %v664
    %v759 = vpack.c.b16 %v669, %v667
    %v760 = vpack.c.b16 %v670, %v668
    %v761 = vpack.c.b16 %v673, %v671
    %v762 = vpack.c.b16 %v674, %v672
    %v763 = vpack.c.b16 %v677, %v675
    %v764 = vpack.c.b16 %v678, %v676
    %v765 = vpack.c.b16 %v681, %v679
    %v766 = vpack.c.b16 %v682, %v680
    %v767 = vpack.c.b16 %v685, %v683
    %v768 = vpack.c.b16 %v686, %v684
    %v769 = vpack.c.b16 %v689, %v687
    %v770 = vpack.c.b16 %v690, %v688
    %v771 = vpack.c.b16 %v693, %v691
    %v772 = vpack.c.b16 %v694, %v692
    %v773 = vpack.c.b16 %v697, %v695
    %v774 = vpack.c.b16 %v698, %v696
    %v775 = vpack.c.b16 %v701, %v699
    %v776 = vpack.c.b16 %v702, %v700
    %v777 = vpack.c.b16 %v705, %v703
    %v778 = vpack.c.b16 %v706, %v704
    %v779 = vpack.c.b16 %v709, %v707
    %v780 = vpack.c.b16 %v710, %v708
    %v781 = vpack.c.b16 %v713, %v711
    %v782 = vpack.c.b16 %v714, %v712
    %v783 = vpack.c.b16 %v717, %v715
    %v784 = vpack.c.b16 %v718, %v716
    %v785 = vpack.c.b16 %v721, %v719
    %v786 = vpack.c.b16 %v722, %v720
    %851 = vmatprep.subr.bf16.mxu0 %v738
    %852 = vmatpush1.bf16.msra.mxu0 %v737
    %853 = vmatprep.subr.bf16.mxu0 %v736
    %854 = vmatpush1.bf16.msra.mxu0 %v735
    %855 = vmatprep.subr.bf16.mxu0 %v734
    %856 = vmatpush1.bf16.msra.mxu0 %v733
    %857 = vmatprep.subr.bf16.mxu0 %v732
    %858 = vmatpush1.bf16.msra.mxu0 %v731
    %859 = vmatprep.subr.bf16.mxu0 %v730
    %860 = vmatpush1.bf16.msra.mxu0 %v729
    %861 = vmatprep.subr.bf16.mxu0 %v728
    %862 = vmatpush1.bf16.msra.mxu0 %v727
    %863 = vmatprep.subr.bf16.mxu0 %v726
    %864 = vmatpush1.bf16.msra.mxu0 %v725
    %865 = vmatprep.subr.bf16.mxu0 %v724
    %866 = vmatpush1.bf16.msra.mxu0 %v723
    %867 = vmatprep.subr.bf16.mxu0 %v754
    %868 = vmatpush2.bf16.msra.mxu0 %v753
    %869 = vmatprep.subr.bf16.mxu0 %v752
    %870 = vmatpush2.bf16.msra.mxu0 %v751
    %871 = vmatprep.subr.bf16.mxu0 %v750
    %872 = vmatpush2.bf16.msra.mxu0 %v749
    %873 = vmatprep.subr.bf16.mxu0 %v748
    %874 = vmatpush2.bf16.msra.mxu0 %v747
    %875 = vmatprep.subr.bf16.mxu0 %v746
    %876 = vmatpush2.bf16.msra.mxu0 %v745
    %877 = vmatprep.subr.bf16.mxu0 %v744
    %878 = vmatpush2.bf16.msra.mxu0 %v743
    %879 = vmatprep.subr.bf16.mxu0 %v742
    %880 = vmatpush2.bf16.msra.mxu0 %v741
    %881 = vmatprep.subr.bf16.mxu0 %v740
    %882 = vmatpush2.bf16.msra.mxu0 %v739
    %883 = vmatprep.mubr.bf16.mxu0 %v404
    %884 = vmatmul.mubr.bf16.gmra.mxu0 %v403
    %v885 = vpop.f32.mrf.mxu0
    %v886 = vadd.f32 %v204, %v885
    %v887 = vpop.f32.mrf.mxu0
    %v888 = vadd.f32 %v208, %v887
    %v889 = vpop.f32.mrf.mxu0
    %v890 = vadd.f32 %v204, %v889
    %v891 = vpop.f32.mrf.mxu0
    %v892 = vadd.f32 %v208, %v891
    %893 = vmatprep.mubr.bf16.mxu0 %v408
    %894 = vmatmul.mubr.bf16.gmra.mxu0 %v407
    %v895 = vpop.f32.mrf.mxu0
    %v896 = vadd.f32 %v204, %v895
    %v897 = vpop.f32.mrf.mxu0
    %v898 = vadd.f32 %v208, %v897
    %v899 = vpop.f32.mrf.mxu0
    %v900 = vadd.f32 %v204, %v899
    %v901 = vpop.f32.mrf.mxu0
    %v902 = vadd.f32 %v208, %v901
    %903 = vmatprep.mubr.bf16.mxu0 %v412
    %904 = vmatmul.mubr.bf16.gmra.mxu0 %v411
    %v905 = vpop.f32.mrf.mxu0
    %v906 = vadd.f32 %v204, %v905
    %v907 = vpop.f32.mrf.mxu0
    %v908 = vadd.f32 %v208, %v907
    %v909 = vpop.f32.mrf.mxu0
    %v910 = vadd.f32 %v204, %v909
    %v911 = vpop.f32.mrf.mxu0
    %v912 = vadd.f32 %v208, %v911
    %913 = vmatprep.mubr.bf16.mxu0 %v416
    %914 = vmatmul.mubr.bf16.gmra.mxu0 %v415
    %v915 = vpop.f32.mrf.mxu0
    %v916 = vadd.f32 %v204, %v915
    %v917 = vpop.f32.mrf.mxu0
    %v918 = vadd.f32 %v208, %v917
    %v919 = vpop.f32.mrf.mxu0
    %v920 = vadd.f32 %v204, %v919
    %v921 = vpop.f32.mrf.mxu0
    %v922 = vadd.f32 %v208, %v921
    %923 = vmatprep.mubr.bf16.mxu0 %v420
    %924 = vmatmul.mubr.bf16.gmra.mxu0 %v419
    %v925 = vpop.f32.mrf.mxu0
    %v926 = vadd.f32 %v204, %v925
    %v927 = vpop.f32.mrf.mxu0
    %v928 = vadd.f32 %v208, %v927
    %v929 = vpop.f32.mrf.mxu0
    %v930 = vadd.f32 %v204, %v929
    %v931 = vpop.f32.mrf.mxu0
    %v932 = vadd.f32 %v208, %v931
    %933 = vmatprep.mubr.bf16.mxu0 %v424
    %934 = vmatmul.mubr.bf16.gmra.mxu0 %v423
    %v935 = vpop.f32.mrf.mxu0
    %v936 = vadd.f32 %v204, %v935
    %v937 = vpop.f32.mrf.mxu0
    %v938 = vadd.f32 %v208, %v937
    %v939 = vpop.f32.mrf.mxu0
    %v940 = vadd.f32 %v204, %v939
    %v941 = vpop.f32.mrf.mxu0
    %v942 = vadd.f32 %v208, %v941
    %943 = vmatprep.mubr.bf16.mxu0 %v428
    %944 = vmatmul.mubr.bf16.gmra.mxu0 %v427
    %v945 = vpop.f32.mrf.mxu0
    %v946 = vadd.f32 %v204, %v945
    %v947 = vpop.f32.mrf.mxu0
    %v948 = vadd.f32 %v208, %v947
    %v949 = vpop.f32.mrf.mxu0
    %v950 = vadd.f32 %v204, %v949
    %v951 = vpop.f32.mrf.mxu0
    %v952 = vadd.f32 %v208, %v951
    %953 = vmatprep.mubr.bf16.mxu0 %v432
    %954 = vmatmul.mubr.bf16.gmra.mxu0 %v431
    %v955 = vpop.f32.mrf.mxu0
    %v956 = vadd.f32 %v204, %v955
    %v957 = vpop.f32.mrf.mxu0
    %v958 = vadd.f32 %v208, %v957
    %v959 = vpop.f32.mrf.mxu0
    %v960 = vadd.f32 %v204, %v959
    %v961 = vpop.f32.mrf.mxu0
    %v962 = vadd.f32 %v208, %v961
    %963 = vmatprep.mubr.bf16.mxu0 %v436
    %964 = vmatmul.mubr.bf16.gmra.mxu0 %v435
    %v965 = vpop.f32.mrf.mxu0
    %v966 = vadd.f32 %v204, %v965
    %v967 = vpop.f32.mrf.mxu0
    %v968 = vadd.f32 %v208, %v967
    %v969 = vpop.f32.mrf.mxu0
    %v970 = vadd.f32 %v204, %v969
    %v971 = vpop.f32.mrf.mxu0
    %v972 = vadd.f32 %v208, %v971
    %973 = vmatprep.mubr.bf16.mxu0 %v440
    %974 = vmatmul.mubr.bf16.gmra.mxu0 %v439
    %v975 = vpop.f32.mrf.mxu0
    %v976 = vadd.f32 %v204, %v975
    %v977 = vpop.f32.mrf.mxu0
    %v978 = vadd.f32 %v208, %v977
    %v979 = vpop.f32.mrf.mxu0
    %v980 = vadd.f32 %v204, %v979
    %v981 = vpop.f32.mrf.mxu0
    %v982 = vadd.f32 %v208, %v981
    %983 = vmatprep.mubr.bf16.mxu0 %v444
    %984 = vmatmul.mubr.bf16.gmra.mxu0 %v443
    %v985 = vpop.f32.mrf.mxu0
    %v986 = vadd.f32 %v204, %v985
    %v987 = vpop.f32.mrf.mxu0
    %v988 = vadd.f32 %v208, %v987
    %v989 = vpop.f32.mrf.mxu0
    %v990 = vadd.f32 %v204, %v989
    %v991 = vpop.f32.mrf.mxu0
    %v992 = vadd.f32 %v208, %v991
    %993 = vmatprep.mubr.bf16.mxu0 %v448
    %994 = vmatmul.mubr.bf16.gmra.mxu0 %v447
    %v995 = vpop.f32.mrf.mxu0
    %v996 = vadd.f32 %v204, %v995
    %v997 = vpop.f32.mrf.mxu0
    %v998 = vadd.f32 %v208, %v997
    %v999 = vpop.f32.mrf.mxu0
    %v1000 = vadd.f32 %v204, %v999
    %v1001 = vpop.f32.mrf.mxu0
    %v1002 = vadd.f32 %v208, %v1001
    %1003 = vmatprep.mubr.bf16.mxu0 %v452
    %1004 = vmatmul.mubr.bf16.gmra.mxu0 %v451
    %v1005 = vpop.f32.mrf.mxu0
    %v1006 = vadd.f32 %v204, %v1005
    %v1007 = vpop.f32.mrf.mxu0
    %v1008 = vadd.f32 %v208, %v1007
    %v1009 = vpop.f32.mrf.mxu0
    %v1010 = vadd.f32 %v204, %v1009
    %v1011 = vpop.f32.mrf.mxu0
    %v1012 = vadd.f32 %v208, %v1011
    %1013 = vmatprep.mubr.bf16.mxu0 %v456
    %1014 = vmatmul.mubr.bf16.gmra.mxu0 %v455
    %v1015 = vpop.f32.mrf.mxu0
    %v1016 = vadd.f32 %v204, %v1015
    %v1017 = vpop.f32.mrf.mxu0
    %v1018 = vadd.f32 %v208, %v1017
    %v1019 = vpop.f32.mrf.mxu0
    %v1020 = vadd.f32 %v204, %v1019
    %v1021 = vpop.f32.mrf.mxu0
    %v1022 = vadd.f32 %v208, %v1021
    %1023 = vmatprep.mubr.bf16.mxu0 %v460
    %1024 = vmatmul.mubr.bf16.gmra.mxu0 %v459
    %v1025 = vpop.f32.mrf.mxu0
    %v1026 = vadd.f32 %v204, %v1025
    %v1027 = vpop.f32.mrf.mxu0
    %v1028 = vadd.f32 %v208, %v1027
    %v1029 = vpop.f32.mrf.mxu0
    %v1030 = vadd.f32 %v204, %v1029
    %v1031 = vpop.f32.mrf.mxu0
    %v1032 = vadd.f32 %v208, %v1031
    %1033 = vmatprep.mubr.bf16.mxu0 %v464
    %1034 = vmatmul.mubr.bf16.gmra.mxu0 %v463
    %v1035 = vpop.f32.mrf.mxu0
    %v1036 = vadd.f32 %v204, %v1035
    %v1037 = vpop.f32.mrf.mxu0
    %v1038 = vadd.f32 %v208, %v1037
    %v1039 = vpop.f32.mrf.mxu0
    %v1040 = vadd.f32 %v204, %v1039
    %v1041 = vpop.f32.mrf.mxu0
    %v1042 = vadd.f32 %v208, %v1041
    %1043 = vdwg.mxu0
    %1044 = vmatprep.subr.bf16.mxu0 %v770
    %1045 = vmatpush1.bf16.msra.mxu0 %v769
    %1046 = vmatprep.subr.bf16.mxu0 %v768
    %1047 = vmatpush1.bf16.msra.mxu0 %v767
    %1048 = vmatprep.subr.bf16.mxu0 %v766
    %1049 = vmatpush1.bf16.msra.mxu0 %v765
    %1050 = vmatprep.subr.bf16.mxu0 %v764
    %1051 = vmatpush1.bf16.msra.mxu0 %v763
    %1052 = vmatprep.subr.bf16.mxu0 %v762
    %1053 = vmatpush1.bf16.msra.mxu0 %v761
    %1054 = vmatprep.subr.bf16.mxu0 %v760
    %1055 = vmatpush1.bf16.msra.mxu0 %v759
    %1056 = vmatprep.subr.bf16.mxu0 %v758
    %1057 = vmatpush1.bf16.msra.mxu0 %v757
    %1058 = vmatprep.subr.bf16.mxu0 %v756
    %1059 = vmatpush1.bf16.msra.mxu0 %v755
    %1060 = vmatprep.subr.bf16.mxu0 %v786
    %1061 = vmatpush2.bf16.msra.mxu0 %v785
    %1062 = vmatprep.subr.bf16.mxu0 %v784
    %1063 = vmatpush2.bf16.msra.mxu0 %v783
    %1064 = vmatprep.subr.bf16.mxu0 %v782
    %1065 = vmatpush2.bf16.msra.mxu0 %v781
    %1066 = vmatprep.subr.bf16.mxu0 %v780
    %1067 = vmatpush2.bf16.msra.mxu0 %v779
    %1068 = vmatprep.subr.bf16.mxu0 %v778
    %1069 = vmatpush2.bf16.msra.mxu0 %v777
    %1070 = vmatprep.subr.bf16.mxu0 %v776
    %1071 = vmatpush2.bf16.msra.mxu0 %v775
    %1072 = vmatprep.subr.bf16.mxu0 %v774
    %1073 = vmatpush2.bf16.msra.mxu0 %v773
    %1074 = vmatprep.subr.bf16.mxu0 %v772
    %1075 = vmatpush2.bf16.msra.mxu0 %v771
    %1076 = vmatprep.mubr.bf16.mxu0 %v406
    %1077 = vmatmul.mubr.bf16.gmra.mxu0 %v405
    %v1078 = vpop.f32.mrf.mxu0
    %v1079 = vadd.f32 %v886, %v1078
    %v1080 = vpop.f32.mrf.mxu0
    %v1081 = vadd.f32 %v888, %v1080
    %v1082 = vpop.f32.mrf.mxu0
    %v1083 = vadd.f32 %v890, %v1082
    %v1084 = vpop.f32.mrf.mxu0
    %v1085 = vadd.f32 %v892, %v1084
    %1086 = vmatprep.mubr.bf16.mxu0 %v410
    %1087 = vmatmul.mubr.bf16.gmra.mxu0 %v409
    %v1088 = vpop.f32.mrf.mxu0
    %v1089 = vadd.f32 %v896, %v1088
    %v1090 = vpop.f32.mrf.mxu0
    %v1091 = vadd.f32 %v898, %v1090
    %v1092 = vpop.f32.mrf.mxu0
    %v1093 = vadd.f32 %v900, %v1092
    %v1094 = vpop.f32.mrf.mxu0
    %v1095 = vadd.f32 %v902, %v1094
    %1096 = vmatprep.mubr.bf16.mxu0 %v414
    %1097 = vmatmul.mubr.bf16.gmra.mxu0 %v413
    %v1098 = vpop.f32.mrf.mxu0
    %v1099 = vadd.f32 %v906, %v1098
    %v1100 = vpop.f32.mrf.mxu0
    %v1101 = vadd.f32 %v908, %v1100
    %v1102 = vpop.f32.mrf.mxu0
    %v1103 = vadd.f32 %v910, %v1102
    %v1104 = vpop.f32.mrf.mxu0
    %v1105 = vadd.f32 %v912, %v1104
    %1106 = vmatprep.mubr.bf16.mxu0 %v418
    %1107 = vmatmul.mubr.bf16.gmra.mxu0 %v417
    %v1108 = vpop.f32.mrf.mxu0
    %v1109 = vadd.f32 %v916, %v1108
    %v1110 = vpop.f32.mrf.mxu0
    %v1111 = vadd.f32 %v918, %v1110
    %v1112 = vpop.f32.mrf.mxu0
    %v1113 = vadd.f32 %v920, %v1112
    %v1114 = vpop.f32.mrf.mxu0
    %v1115 = vadd.f32 %v922, %v1114
    %1116 = vmatprep.mubr.bf16.mxu0 %v422
    %1117 = vmatmul.mubr.bf16.gmra.mxu0 %v421
    %v1118 = vpop.f32.mrf.mxu0
    %v1119 = vadd.f32 %v926, %v1118
    %v1120 = vpop.f32.mrf.mxu0
    %v1121 = vadd.f32 %v928, %v1120
    %v1122 = vpop.f32.mrf.mxu0
    %v1123 = vadd.f32 %v930, %v1122
    %v1124 = vpop.f32.mrf.mxu0
    %v1125 = vadd.f32 %v932, %v1124
    %1126 = vmatprep.mubr.bf16.mxu0 %v426
    %1127 = vmatmul.mubr.bf16.gmra.mxu0 %v425
    %v1128 = vpop.f32.mrf.mxu0
    %v1129 = vadd.f32 %v936, %v1128
    %v1130 = vpop.f32.mrf.mxu0
    %v1131 = vadd.f32 %v938, %v1130
    %v1132 = vpop.f32.mrf.mxu0
    %v1133 = vadd.f32 %v940, %v1132
    %v1134 = vpop.f32.mrf.mxu0
    %v1135 = vadd.f32 %v942, %v1134
    %1136 = vmatprep.mubr.bf16.mxu0 %v430
    %1137 = vmatmul.mubr.bf16.gmra.mxu0 %v429
    %v1138 = vpop.f32.mrf.mxu0
    %v1139 = vadd.f32 %v946, %v1138
    %v1140 = vpop.f32.mrf.mxu0
    %v1141 = vadd.f32 %v948, %v1140
    %v1142 = vpop.f32.mrf.mxu0
    %v1143 = vadd.f32 %v950, %v1142
    %v1144 = vpop.f32.mrf.mxu0
    %v1145 = vadd.f32 %v952, %v1144
    %1146 = vmatprep.mubr.bf16.mxu0 %v434
    %1147 = vmatmul.mubr.bf16.gmra.mxu0 %v433
    %v1148 = vpop.f32.mrf.mxu0
    %v1149 = vadd.f32 %v956, %v1148
    %v1150 = vpop.f32.mrf.mxu0
    %v1151 = vadd.f32 %v958, %v1150
    %v1152 = vpop.f32.mrf.mxu0
    %v1153 = vadd.f32 %v960, %v1152
    %v1154 = vpop.f32.mrf.mxu0
    %v1155 = vadd.f32 %v962, %v1154
    %1156 = vmatprep.mubr.bf16.mxu0 %v438
    %1157 = vmatmul.mubr.bf16.gmra.mxu0 %v437
    %v1158 = vpop.f32.mrf.mxu0
    %v1159 = vadd.f32 %v966, %v1158
    %v1160 = vpop.f32.mrf.mxu0
    %v1161 = vadd.f32 %v968, %v1160
    %v1162 = vpop.f32.mrf.mxu0
    %v1163 = vadd.f32 %v970, %v1162
    %v1164 = vpop.f32.mrf.mxu0
    %v1165 = vadd.f32 %v972, %v1164
    %1166 = vmatprep.mubr.bf16.mxu0 %v442
    %1167 = vmatmul.mubr.bf16.gmra.mxu0 %v441
    %v1168 = vpop.f32.mrf.mxu0
    %v1169 = vadd.f32 %v976, %v1168
    %v1170 = vpop.f32.mrf.mxu0
    %v1171 = vadd.f32 %v978, %v1170
    %v1172 = vpop.f32.mrf.mxu0
    %v1173 = vadd.f32 %v980, %v1172
    %v1174 = vpop.f32.mrf.mxu0
    %v1175 = vadd.f32 %v982, %v1174
    %1176 = vmatprep.mubr.bf16.mxu0 %v446
    %1177 = vmatmul.mubr.bf16.gmra.mxu0 %v445
    %v1178 = vpop.f32.mrf.mxu0
    %v1179 = vadd.f32 %v986, %v1178
    %v1180 = vpop.f32.mrf.mxu0
    %v1181 = vadd.f32 %v988, %v1180
    %v1182 = vpop.f32.mrf.mxu0
    %v1183 = vadd.f32 %v990, %v1182
    %v1184 = vpop.f32.mrf.mxu0
    %v1185 = vadd.f32 %v992, %v1184
    %1186 = vmatprep.mubr.bf16.mxu0 %v450
    %1187 = vmatmul.mubr.bf16.gmra.mxu0 %v449
    %v1188 = vpop.f32.mrf.mxu0
    %v1189 = vadd.f32 %v996, %v1188
    %v1190 = vpop.f32.mrf.mxu0
    %v1191 = vadd.f32 %v998, %v1190
    %v1192 = vpop.f32.mrf.mxu0
    %v1193 = vadd.f32 %v1000, %v1192
    %v1194 = vpop.f32.mrf.mxu0
    %v1195 = vadd.f32 %v1002, %v1194
    %1196 = vmatprep.mubr.bf16.mxu0 %v454
    %1197 = vmatmul.mubr.bf16.gmra.mxu0 %v453
    %v1198 = vpop.f32.mrf.mxu0
    %v1199 = vadd.f32 %v1006, %v1198
    %v1200 = vpop.f32.mrf.mxu0
    %v1201 = vadd.f32 %v1008, %v1200
    %v1202 = vpop.f32.mrf.mxu0
    %v1203 = vadd.f32 %v1010, %v1202
    %v1204 = vpop.f32.mrf.mxu0
    %v1205 = vadd.f32 %v1012, %v1204
    %1206 = vmatprep.mubr.bf16.mxu0 %v458
    %1207 = vmatmul.mubr.bf16.gmra.mxu0 %v457
    %v1208 = vpop.f32.mrf.mxu0
    %v1209 = vadd.f32 %v1016, %v1208
    %v1210 = vpop.f32.mrf.mxu0
    %v1211 = vadd.f32 %v1018, %v1210
    %v1212 = vpop.f32.mrf.mxu0
    %v1213 = vadd.f32 %v1020, %v1212
    %v1214 = vpop.f32.mrf.mxu0
    %v1215 = vadd.f32 %v1022, %v1214
    %1216 = vmatprep.mubr.bf16.mxu0 %v462
    %1217 = vmatmul.mubr.bf16.gmra.mxu0 %v461
    %v1218 = vpop.f32.mrf.mxu0
    %v1219 = vadd.f32 %v1026, %v1218
    %v1220 = vpop.f32.mrf.mxu0
    %v1221 = vadd.f32 %v1028, %v1220
    %v1222 = vpop.f32.mrf.mxu0
    %v1223 = vadd.f32 %v1030, %v1222
    %v1224 = vpop.f32.mrf.mxu0
    %v1225 = vadd.f32 %v1032, %v1224
    %1226 = vmatprep.mubr.bf16.mxu0 %v466
    %1227 = vmatmul.mubr.bf16.gmra.mxu0 %v465
    %v1228 = vpop.f32.mrf.mxu0
    %v1229 = vadd.f32 %v1036, %v1228
    %v1230 = vpop.f32.mrf.mxu0
    %v1231 = vadd.f32 %v1038, %v1230
    %v1232 = vpop.f32.mrf.mxu0
    %v1233 = vadd.f32 %v1040, %v1232
    %v1234 = vpop.f32.mrf.mxu0
    %v1235 = vadd.f32 %v1042, %v1234
    %1236 = vdwg.mxu0
    %vm1237 = vcmp.ge.f32.partialorder %v1079, 0.0
    %vm1238 = vcmp.ge.f32.partialorder %v1081, 0.0
    %vm1239 = vcmp.ge.f32.partialorder %v1083, 0.0
    %vm1240 = vcmp.ge.f32.partialorder %v1085, 0.0
    %vm1241 = vcmp.ge.f32.partialorder %v1089, 0.0
    %vm1242 = vcmp.ge.f32.partialorder %v1091, 0.0
    %vm1243 = vcmp.ge.f32.partialorder %v1093, 0.0
    %vm1244 = vcmp.ge.f32.partialorder %v1095, 0.0
    %vm1245 = vcmp.ge.f32.partialorder %v1099, 0.0
    %vm1246 = vcmp.ge.f32.partialorder %v1101, 0.0
    %vm1247 = vcmp.ge.f32.partialorder %v1103, 0.0
    %vm1248 = vcmp.ge.f32.partialorder %v1105, 0.0
    %vm1249 = vcmp.ge.f32.partialorder %v1109, 0.0
    %vm1250 = vcmp.ge.f32.partialorder %v1111, 0.0
    %vm1251 = vcmp.ge.f32.partialorder %v1113, 0.0
    %vm1252 = vcmp.ge.f32.partialorder %v1115, 0.0
    %vm1253 = vcmp.ge.f32.partialorder %v1119, 0.0
    %vm1254 = vcmp.ge.f32.partialorder %v1121, 0.0
    %vm1255 = vcmp.ge.f32.partialorder %v1123, 0.0
    %vm1256 = vcmp.ge.f32.partialorder %v1125, 0.0
    %vm1257 = vcmp.ge.f32.partialorder %v1129, 0.0
    %vm1258 = vcmp.ge.f32.partialorder %v1131, 0.0
    %vm1259 = vcmp.ge.f32.partialorder %v1133, 0.0
    %vm1260 = vcmp.ge.f32.partialorder %v1135, 0.0
    %vm1261 = vcmp.ge.f32.partialorder %v1139, 0.0
    %vm1262 = vcmp.ge.f32.partialorder %v1141, 0.0
    %vm1263 = vcmp.ge.f32.partialorder %v1143, 0.0
    %vm1264 = vcmp.ge.f32.partialorder %v1145, 0.0
    %vm1265 = vcmp.ge.f32.partialorder %v1149, 0.0
    %vm1266 = vcmp.ge.f32.partialorder %v1151, 0.0
    %vm1267 = vcmp.ge.f32.partialorder %v1153, 0.0
    %vm1268 = vcmp.ge.f32.partialorder %v1155, 0.0
    %vm1269 = vcmp.ge.f32.partialorder %v1159, 0.0
    %vm1270 = vcmp.ge.f32.partialorder %v1161, 0.0
    %vm1271 = vcmp.ge.f32.partialorder %v1163, 0.0
    %vm1272 = vcmp.ge.f32.partialorder %v1165, 0.0
    %vm1273 = vcmp.ge.f32.partialorder %v1169, 0.0
    %vm1274 = vcmp.ge.f32.partialorder %v1171, 0.0
    %vm1275 = vcmp.ge.f32.partialorder %v1173, 0.0
    %vm1276 = vcmp.ge.f32.partialorder %v1175, 0.0
    %vm1277 = vcmp.ge.f32.partialorder %v1179, 0.0
    %vm1278 = vcmp.ge.f32.partialorder %v1181, 0.0
    %vm1279 = vcmp.ge.f32.partialorder %v1183, 0.0
    %vm1280 = vcmp.ge.f32.partialorder %v1185, 0.0
    %vm1281 = vcmp.ge.f32.partialorder %v1189, 0.0
    %vm1282 = vcmp.ge.f32.partialorder %v1191, 0.0
    %vm1283 = vcmp.ge.f32.partialorder %v1193, 0.0
    %vm1284 = vcmp.ge.f32.partialorder %v1195, 0.0
    %vm1285 = vcmp.ge.f32.partialorder %v1199, 0.0
    %vm1286 = vcmp.ge.f32.partialorder %v1201, 0.0
    %vm1287 = vcmp.ge.f32.partialorder %v1203, 0.0
    %vm1288 = vcmp.ge.f32.partialorder %v1205, 0.0
    %vm1289 = vcmp.ge.f32.partialorder %v1209, 0.0
    %vm1290 = vcmp.ge.f32.partialorder %v1211, 0.0
    %vm1291 = vcmp.ge.f32.partialorder %v1213, 0.0
    %vm1292 = vcmp.ge.f32.partialorder %v1215, 0.0
    %vm1293 = vcmp.ge.f32.partialorder %v1219, 0.0
    %vm1294 = vcmp.ge.f32.partialorder %v1221, 0.0
    %vm1295 = vcmp.ge.f32.partialorder %v1223, 0.0
    %vm1296 = vcmp.ge.f32.partialorder %v1225, 0.0
    %vm1297 = vcmp.ge.f32.partialorder %v1229, 0.0
    %vm1298 = vcmp.ge.f32.partialorder %v1231, 0.0
    %vm1299 = vcmp.ge.f32.partialorder %v1233, 0.0
    %vm1300 = vcmp.ge.f32.partialorder %v1235, 0.0
    %v1301 = vmul.f32 %v1079, 0.2
    %v1302 = vmul.f32 %v1081, 0.2
    %v1303 = vmul.f32 %v1083, 0.2
    %v1304 = vmul.f32 %v1085, 0.2
    %v1305 = vmul.f32 %v1089, 0.2
    %v1306 = vmul.f32 %v1091, 0.2
    %v1307 = vmul.f32 %v1093, 0.2
    %v1308 = vmul.f32 %v1095, 0.2
    %v1309 = vmul.f32 %v1099, 0.2
    %v1310 = vmul.f32 %v1101, 0.2
    %v1311 = vmul.f32 %v1103, 0.2
    %v1312 = vmul.f32 %v1105, 0.2
    %v1313 = vmul.f32 %v1109, 0.2
    %v1314 = vmul.f32 %v1111, 0.2
    %v1315 = vmul.f32 %v1113, 0.2
    %v1316 = vmul.f32 %v1115, 0.2
    %v1317 = vmul.f32 %v1119, 0.2
    %v1318 = vmul.f32 %v1121, 0.2
    %v1319 = vmul.f32 %v1123, 0.2
    %v1320 = vmul.f32 %v1125, 0.2
    %v1321 = vmul.f32 %v1129, 0.2
    %v1322 = vmul.f32 %v1131, 0.2
    %v1323 = vmul.f32 %v1133, 0.2
    %v1324 = vmul.f32 %v1135, 0.2
    %v1325 = vmul.f32 %v1139, 0.2
    %v1326 = vmul.f32 %v1141, 0.2
    %v1327 = vmul.f32 %v1143, 0.2
    %v1328 = vmul.f32 %v1145, 0.2
    %v1329 = vmul.f32 %v1149, 0.2
    %v1330 = vmul.f32 %v1151, 0.2
    %v1331 = vmul.f32 %v1153, 0.2
    %v1332 = vmul.f32 %v1155, 0.2
    %v1333 = vmul.f32 %v1159, 0.2
    %v1334 = vmul.f32 %v1161, 0.2
    %v1335 = vmul.f32 %v1163, 0.2
    %v1336 = vmul.f32 %v1165, 0.2
    %v1337 = vmul.f32 %v1169, 0.2
    %v1338 = vmul.f32 %v1171, 0.2
    %v1339 = vmul.f32 %v1173, 0.2
    %v1340 = vmul.f32 %v1175, 0.2
    %v1341 = vmul.f32 %v1179, 0.2
    %v1342 = vmul.f32 %v1181, 0.2
    %v1343 = vmul.f32 %v1183, 0.2
    %v1344 = vmul.f32 %v1185, 0.2
    %v1345 = vmul.f32 %v1189, 0.2
    %v1346 = vmul.f32 %v1191, 0.2
    %v1347 = vmul.f32 %v1193, 0.2
    %v1348 = vmul.f32 %v1195, 0.2
    %v1349 = vmul.f32 %v1199, 0.2
    %v1350 = vmul.f32 %v1201, 0.2
    %v1351 = vmul.f32 %v1203, 0.2
    %v1352 = vmul.f32 %v1205, 0.2
    %v1353 = vmul.f32 %v1209, 0.2
    %v1354 = vmul.f32 %v1211, 0.2
    %v1355 = vmul.f32 %v1213, 0.2
    %v1356 = vmul.f32 %v1215, 0.2
    %v1357 = vmul.f32 %v1219, 0.2
    %v1358 = vmul.f32 %v1221, 0.2
    %v1359 = vmul.f32 %v1223, 0.2
    %v1360 = vmul.f32 %v1225, 0.2
    %v1361 = vmul.f32 %v1229, 0.2
    %v1362 = vmul.f32 %v1231, 0.2
    %v1363 = vmul.f32 %v1233, 0.2
    %v1364 = vmul.f32 %v1235, 0.2
    %v1365 = vsel %vm1237, %v1079, %v1301
    %v1366 = vsel %vm1238, %v1081, %v1302
    %v1367 = vsel %vm1239, %v1083, %v1303
    %v1368 = vsel %vm1240, %v1085, %v1304
    %v1369 = vsel %vm1241, %v1089, %v1305
    %v1370 = vsel %vm1242, %v1091, %v1306
    %v1371 = vsel %vm1243, %v1093, %v1307
    %v1372 = vsel %vm1244, %v1095, %v1308
    %v1373 = vsel %vm1245, %v1099, %v1309
    %v1374 = vsel %vm1246, %v1101, %v1310
    %v1375 = vsel %vm1247, %v1103, %v1311
    %v1376 = vsel %vm1248, %v1105, %v1312
    %v1377 = vsel %vm1249, %v1109, %v1313
    %v1378 = vsel %vm1250, %v1111, %v1314
    %v1379 = vsel %vm1251, %v1113, %v1315
    %v1380 = vsel %vm1252, %v1115, %v1316
    %v1381 = vsel %vm1253, %v1119, %v1317
    %v1382 = vsel %vm1254, %v1121, %v1318
    %v1383 = vsel %vm1255, %v1123, %v1319
    %v1384 = vsel %vm1256, %v1125, %v1320
    %v1385 = vsel %vm1257, %v1129, %v1321
    %v1386 = vsel %vm1258, %v1131, %v1322
    %v1387 = vsel %vm1259, %v1133, %v1323
    %v1388 = vsel %vm1260, %v1135, %v1324
    %v1389 = vsel %vm1261, %v1139, %v1325
    %v1390 = vsel %vm1262, %v1141, %v1326
    %v1391 = vsel %vm1263, %v1143, %v1327
    %v1392 = vsel %vm1264, %v1145, %v1328
    %v1393 = vsel %vm1265, %v1149, %v1329
    %v1394 = vsel %vm1266, %v1151, %v1330
    %v1395 = vsel %vm1267, %v1153, %v1331
    %v1396 = vsel %vm1268, %v1155, %v1332
    %v1397 = vsel %vm1269, %v1159, %v1333
    %v1398 = vsel %vm1270, %v1161, %v1334
    %v1399 = vsel %vm1271, %v1163, %v1335
    %v1400 = vsel %vm1272, %v1165, %v1336
    %v1401 = vsel %vm1273, %v1169, %v1337
    %v1402 = vsel %vm1274, %v1171, %v1338
    %v1403 = vsel %vm1275, %v1173, %v1339
    %v1404 = vsel %vm1276, %v1175, %v1340
    %v1405 = vsel %vm1277, %v1179, %v1341
    %v1406 = vsel %vm1278, %v1181, %v1342
    %v1407 = vsel %vm1279, %v1183, %v1343
    %v1408 = vsel %vm1280, %v1185, %v1344
    %v1409 = vsel %vm1281, %v1189, %v1345
    %v1410 = vsel %vm1282, %v1191, %v1346
    %v1411 = vsel %vm1283, %v1193, %v1347
    %v1412 = vsel %vm1284, %v1195, %v1348
    %v1413 = vsel %vm1285, %v1199, %v1349
    %v1414 = vsel %vm1286, %v1201, %v1350
    %v1415 = vsel %vm1287, %v1203, %v1351
    %v1416 = vsel %vm1288, %v1205, %v1352
    %v1417 = vsel %vm1289, %v1209, %v1353
    %v1418 = vsel %vm1290, %v1211, %v1354
    %v1419 = vsel %vm1291, %v1213, %v1355
    %v1420 = vsel %vm1292, %v1215, %v1356
    %v1421 = vsel %vm1293, %v1219, %v1357
    %v1422 = vsel %vm1294, %v1221, %v1358
    %v1423 = vsel %vm1295, %v1223, %v1359
    %v1424 = vsel %vm1296, %v1225, %v1360
    %v1425 = vsel %vm1297, %v1229, %v1361
    %v1426 = vsel %vm1298, %v1231, %v1362
    %v1427 = vsel %vm1299, %v1233, %v1363
    %v1428 = vsel %vm1300, %v1235, %v1364
    %v1429 = vpack.c.bf16 %v1367, %v1365
    %v1430 = vpack.c.bf16 %v1368, %v1366
    %v1431 = vpack.c.bf16 %v1371, %v1369
    %v1432 = vpack.c.bf16 %v1372, %v1370
    %v1433 = vpack.c.bf16 %v1375, %v1373
    %v1434 = vpack.c.bf16 %v1376, %v1374
    %v1435 = vpack.c.bf16 %v1379, %v1377
    %v1436 = vpack.c.bf16 %v1380, %v1378
    %v1437 = vpack.c.bf16 %v1383, %v1381
    %v1438 = vpack.c.bf16 %v1384, %v1382
    %v1439 = vpack.c.bf16 %v1387, %v1385
    %v1440 = vpack.c.bf16 %v1388, %v1386
    %v1441 = vpack.c.bf16 %v1391, %v1389
    %v1442 = vpack.c.bf16 %v1392, %v1390
    %v1443 = vpack.c.bf16 %v1395, %v1393
    %v1444 = vpack.c.bf16 %v1396, %v1394
    %v1445 = vpack.c.bf16 %v1399, %v1397
    %v1446 = vpack.c.bf16 %v1400, %v1398
    %v1447 = vpack.c.bf16 %v1403, %v1401
    %v1448 = vpack.c.bf16 %v1404, %v1402
    %v1449 = vpack.c.bf16 %v1407, %v1405
    %v1450 = vpack.c.bf16 %v1408, %v1406
    %v1451 = vpack.c.bf16 %v1411, %v1409
    %v1452 = vpack.c.bf16 %v1412, %v1410
    %v1453 = vpack.c.bf16 %v1415, %v1413
    %v1454 = vpack.c.bf16 %v1416, %v1414
    %v1455 = vpack.c.bf16 %v1419, %v1417
    %v1456 = vpack.c.bf16 %v1420, %v1418
    %v1457 = vpack.c.bf16 %v1423, %v1421
    %v1458 = vpack.c.bf16 %v1424, %v1422
    %v1459 = vpack.c.bf16 %v1427, %v1425
    %v1460 = vpack.c.bf16 %v1428, %v1426
    %v1461 = vld [vmem:[#allocation8] sm:$0xf]
    %v1462 = vld [vmem:[#allocation8 + $0x4] sm:$0xf]
    %v1463 = vld [vmem:[#allocation8 + $0x8] sm:$0xf]
    %v1464 = vld [vmem:[#allocation8 + $0xc] sm:$0xf]
    %v1465 = vld [vmem:[#allocation8 + $0x10] sm:$0xf]
    %v1466 = vld [vmem:[#allocation8 + $0x14] sm:$0xf]
    %v1467 = vld [vmem:[#allocation8 + $0x18] sm:$0xf]
    %v1468 = vld [vmem:[#allocation8 + $0x1c] sm:$0xf]
    %v1469 = vld [vmem:[#allocation8 + $0x20] sm:$0xf]
    %v1470 = vld [vmem:[#allocation8 + $0x24] sm:$0xf]
    %v1471 = vld [vmem:[#allocation8 + $0x28] sm:$0xf]
    %v1472 = vld [vmem:[#allocation8 + $0x2c] sm:$0xf]
    %v1473 = vld [vmem:[#allocation8 + $0x30] sm:$0xf]
    %v1474 = vld [vmem:[#allocation8 + $0x34] sm:$0xf]
    %v1475 = vld [vmem:[#allocation8 + $0x38] sm:$0xf]
    %v1476 = vld [vmem:[#allocation8 + $0x3c] sm:$0xf]
    %v1477 = vld [vmem:[#allocation8 + $0x40] sm:$0xf]
    %v1478 = vld [vmem:[#allocation8 + $0x44] sm:$0xf]
    %v1479 = vld [vmem:[#allocation8 + $0x48] sm:$0xf]
    %v1480 = vld [vmem:[#allocation8 + $0x4c] sm:$0xf]
    %v1481 = vld [vmem:[#allocation8 + $0x50] sm:$0xf]
    %v1482 = vld [vmem:[#allocation8 + $0x54] sm:$0xf]
    %v1483 = vld [vmem:[#allocation8 + $0x58] sm:$0xf]
    %v1484 = vld [vmem:[#allocation8 + $0x5c] sm:$0xf]
    %v1485 = vld [vmem:[#allocation8 + $0x60] sm:$0xf]
    %v1486 = vld [vmem:[#allocation8 + $0x64] sm:$0xf]
    %v1487 = vld [vmem:[#allocation8 + $0x68] sm:$0xf]
    %v1488 = vld [vmem:[#allocation8 + $0x6c] sm:$0xf]
    %v1489 = vld [vmem:[#allocation8 + $0x70] sm:$0xf]
    %v1490 = vld [vmem:[#allocation8 + $0x74] sm:$0xf]
    %v1491 = vld [vmem:[#allocation8 + $0x78] sm:$0xf]
    %v1492 = vld [vmem:[#allocation8 + $0x7c] sm:$0xf]
    %v1493 = vld [vmem:[%s4] sm:$0x1]
    %v1495 = vlaneseq
    %v1496 = vshrl.u32 %v1495, 7
    %v1497 = vsub.s32 0, %v1496
    %v1498 = vrot.slane %v1493, %v1497
    %v1532 = vunpack.c.l.b16 %v1461
    %v1533 = vunpack.c.l.b16 %v1462
    %v1534 = vunpack.c.l.b16 %v1463
    %v1535 = vunpack.c.l.b16 %v1464
    %v1536 = vunpack.c.l.b16 %v1465
    %v1537 = vunpack.c.l.b16 %v1466
    %v1538 = vunpack.c.l.b16 %v1467
    %v1539 = vunpack.c.l.b16 %v1468
    %v1540 = vunpack.c.l.b16 %v1469
    %v1541 = vunpack.c.l.b16 %v1470
    %v1542 = vunpack.c.l.b16 %v1471
    %v1543 = vunpack.c.l.b16 %v1472
    %v1544 = vunpack.c.l.b16 %v1473
    %v1545 = vunpack.c.l.b16 %v1474
    %v1546 = vunpack.c.l.b16 %v1475
    %v1547 = vunpack.c.l.b16 %v1476
    %v1548 = vunpack.c.l.b16 %v1477
    %v1549 = vunpack.c.l.b16 %v1478
    %v1550 = vunpack.c.l.b16 %v1479
    %v1551 = vunpack.c.l.b16 %v1480
    %v1552 = vunpack.c.l.b16 %v1481
    %v1553 = vunpack.c.l.b16 %v1482
    %v1554 = vunpack.c.l.b16 %v1483
    %v1555 = vunpack.c.l.b16 %v1484
    %v1556 = vunpack.c.l.b16 %v1485
    %v1557 = vunpack.c.l.b16 %v1486
    %v1558 = vunpack.c.l.b16 %v1487
    %v1559 = vunpack.c.l.b16 %v1488
    %v1560 = vunpack.c.l.b16 %v1489
    %v1561 = vunpack.c.l.b16 %v1490
    %v1562 = vunpack.c.l.b16 %v1491
    %v1563 = vunpack.c.l.b16 %v1492
    %v1564 = vpack.c.b16 %v1533, %v1532
    %v1565 = vpack.c.b16 %v1535, %v1534
    %v1566 = vpack.c.b16 %v1537, %v1536
    %v1567 = vpack.c.b16 %v1539, %v1538
    %v1568 = vpack.c.b16 %v1541, %v1540
    %v1569 = vpack.c.b16 %v1543, %v1542
    %v1570 = vpack.c.b16 %v1545, %v1544
    %v1571 = vpack.c.b16 %v1547, %v1546
    %v1572 = vpack.c.b16 %v1549, %v1548
    %v1573 = vpack.c.b16 %v1551, %v1550
    %v1574 = vpack.c.b16 %v1553, %v1552
    %v1575 = vpack.c.b16 %v1555, %v1554
    %v1576 = vpack.c.b16 %v1557, %v1556
    %v1577 = vpack.c.b16 %v1559, %v1558
    %v1578 = vpack.c.b16 %v1561, %v1560
    %v1579 = vpack.c.b16 %v1563, %v1562
    %1596 = vmatprep.subr.bf16.mxu0 0
    %1597 = vmatpush1.bf16.msra.mxu0 %v1571
    %1598 = vmatprep.subr.bf16.mxu0 0
    %1599 = vmatpush1.bf16.msra.mxu0 %v1570
    %1600 = vmatprep.subr.bf16.mxu0 0
    %1601 = vmatpush1.bf16.msra.mxu0 %v1569
    %1602 = vmatprep.subr.bf16.mxu0 0
    %1603 = vmatpush1.bf16.msra.mxu0 %v1568
    %1604 = vmatprep.subr.bf16.mxu0 0
    %1605 = vmatpush1.bf16.msra.mxu0 %v1567
    %1606 = vmatprep.subr.bf16.mxu0 0
    %1607 = vmatpush1.bf16.msra.mxu0 %v1566
    %1608 = vmatprep.subr.bf16.mxu0 0
    %1609 = vmatpush1.bf16.msra.mxu0 %v1565
    %1610 = vmatprep.subr.bf16.mxu0 0
    %1611 = vmatpush1.bf16.msra.mxu0 %v1564
    %1612 = vmatprep.subr.bf16.mxu0 0
    %1613 = vmatpush2.bf16.msra.mxu0 %v1579
    %1614 = vmatprep.subr.bf16.mxu0 0
    %1615 = vmatpush2.bf16.msra.mxu0 %v1578
    %1616 = vmatprep.subr.bf16.mxu0 0
    %1617 = vmatpush2.bf16.msra.mxu0 %v1577
    %1618 = vmatprep.subr.bf16.mxu0 0
    %1619 = vmatpush2.bf16.msra.mxu0 %v1576
    %1620 = vmatprep.subr.bf16.mxu0 0
    %1621 = vmatpush2.bf16.msra.mxu0 %v1575
    %1622 = vmatprep.subr.bf16.mxu0 0
    %1623 = vmatpush2.bf16.msra.mxu0 %v1574
    %1624 = vmatprep.subr.bf16.mxu0 0
    %1625 = vmatpush2.bf16.msra.mxu0 %v1573
    %1626 = vmatprep.subr.bf16.mxu0 0
    %1627 = vmatpush2.bf16.msra.mxu0 %v1572
    %1628 = vmatprep.mubr.bf16.mxu0 %v1430
    %1629 = vmatmul.mubr.bf16.gmra.mxu0 %v1429
    %v1630 = vpop.f32.mrf.mxu0
    %v1631 = vadd.f32 %v1498, %v1630
    %v1632 = vpop.f32.mrf.mxu0
    %v1633 = vpop.f32.mrf.mxu0
    %v1634 = vadd.f32 %v1498, %v1633
    %v1635 = vpop.f32.mrf.mxu0
    %1636 = vmatprep.mubr.bf16.mxu0 %v1432
    %1637 = vmatmul.mubr.bf16.gmra.mxu0 %v1431
    %v1638 = vpop.f32.mrf.mxu0
    %v1639 = vadd.f32 %v1498, %v1638
    %v1640 = vpop.f32.mrf.mxu0
    %v1641 = vpop.f32.mrf.mxu0
    %v1642 = vadd.f32 %v1498, %v1641
    %v1643 = vpop.f32.mrf.mxu0
    %1644 = vmatprep.mubr.bf16.mxu0 %v1434
    %1645 = vmatmul.mubr.bf16.gmra.mxu0 %v1433
    %v1646 = vpop.f32.mrf.mxu0
    %v1647 = vadd.f32 %v1498, %v1646
    %v1648 = vpop.f32.mrf.mxu0
    %v1649 = vpop.f32.mrf.mxu0
    %v1650 = vadd.f32 %v1498, %v1649
    %v1651 = vpop.f32.mrf.mxu0
    %1652 = vmatprep.mubr.bf16.mxu0 %v1436
    %1653 = vmatmul.mubr.bf16.gmra.mxu0 %v1435
    %v1654 = vpop.f32.mrf.mxu0
    %v1655 = vadd.f32 %v1498, %v1654
    %v1656 = vpop.f32.mrf.mxu0
    %v1657 = vpop.f32.mrf.mxu0
    %v1658 = vadd.f32 %v1498, %v1657
    %v1659 = vpop.f32.mrf.mxu0
    %1660 = vmatprep.mubr.bf16.mxu0 %v1438
    %1661 = vmatmul.mubr.bf16.gmra.mxu0 %v1437
    %v1662 = vpop.f32.mrf.mxu0
    %v1663 = vadd.f32 %v1498, %v1662
    %v1664 = vpop.f32.mrf.mxu0
    %v1665 = vpop.f32.mrf.mxu0
    %v1666 = vadd.f32 %v1498, %v1665
    %v1667 = vpop.f32.mrf.mxu0
    %1668 = vmatprep.mubr.bf16.mxu0 %v1440
    %1669 = vmatmul.mubr.bf16.gmra.mxu0 %v1439
    %v1670 = vpop.f32.mrf.mxu0
    %v1671 = vadd.f32 %v1498, %v1670
    %v1672 = vpop.f32.mrf.mxu0
    %v1673 = vpop.f32.mrf.mxu0
    %v1674 = vadd.f32 %v1498, %v1673
    %v1675 = vpop.f32.mrf.mxu0
    %1676 = vmatprep.mubr.bf16.mxu0 %v1442
    %1677 = vmatmul.mubr.bf16.gmra.mxu0 %v1441
    %v1678 = vpop.f32.mrf.mxu0
    %v1679 = vadd.f32 %v1498, %v1678
    %v1680 = vpop.f32.mrf.mxu0
    %v1681 = vpop.f32.mrf.mxu0
    %v1682 = vadd.f32 %v1498, %v1681
    %v1683 = vpop.f32.mrf.mxu0
    %1684 = vmatprep.mubr.bf16.mxu0 %v1444
    %1685 = vmatmul.mubr.bf16.gmra.mxu0 %v1443
    %v1686 = vpop.f32.mrf.mxu0
    %v1687 = vadd.f32 %v1498, %v1686
    %v1688 = vpop.f32.mrf.mxu0
    %v1689 = vpop.f32.mrf.mxu0
    %v1690 = vadd.f32 %v1498, %v1689
    %v1691 = vpop.f32.mrf.mxu0
    %1692 = vmatprep.mubr.bf16.mxu0 %v1446
    %1693 = vmatmul.mubr.bf16.gmra.mxu0 %v1445
    %v1694 = vpop.f32.mrf.mxu0
    %v1695 = vadd.f32 %v1498, %v1694
    %v1696 = vpop.f32.mrf.mxu0
    %v1697 = vpop.f32.mrf.mxu0
    %v1698 = vadd.f32 %v1498, %v1697
    %v1699 = vpop.f32.mrf.mxu0
    %1700 = vmatprep.mubr.bf16.mxu0 %v1448
    %1701 = vmatmul.mubr.bf16.gmra.mxu0 %v1447
    %v1702 = vpop.f32.mrf.mxu0
    %v1703 = vadd.f32 %v1498, %v1702
    %v1704 = vpop.f32.mrf.mxu0
    %v1705 = vpop.f32.mrf.mxu0
    %v1706 = vadd.f32 %v1498, %v1705
    %v1707 = vpop.f32.mrf.mxu0
    %1708 = vmatprep.mubr.bf16.mxu0 %v1450
    %1709 = vmatmul.mubr.bf16.gmra.mxu0 %v1449
    %v1710 = vpop.f32.mrf.mxu0
    %v1711 = vadd.f32 %v1498, %v1710
    %v1712 = vpop.f32.mrf.mxu0
    %v1713 = vpop.f32.mrf.mxu0
    %v1714 = vadd.f32 %v1498, %v1713
    %v1715 = vpop.f32.mrf.mxu0
    %1716 = vmatprep.mubr.bf16.mxu0 %v1452
    %1717 = vmatmul.mubr.bf16.gmra.mxu0 %v1451
    %v1718 = vpop.f32.mrf.mxu0
    %v1719 = vadd.f32 %v1498, %v1718
    %v1720 = vpop.f32.mrf.mxu0
    %v1721 = vpop.f32.mrf.mxu0
    %v1722 = vadd.f32 %v1498, %v1721
    %v1723 = vpop.f32.mrf.mxu0
    %1724 = vmatprep.mubr.bf16.mxu0 %v1454
    %1725 = vmatmul.mubr.bf16.gmra.mxu0 %v1453
    %v1726 = vpop.f32.mrf.mxu0
    %v1727 = vadd.f32 %v1498, %v1726
    %v1728 = vpop.f32.mrf.mxu0
    %v1729 = vpop.f32.mrf.mxu0
    %v1730 = vadd.f32 %v1498, %v1729
    %v1731 = vpop.f32.mrf.mxu0
    %1732 = vmatprep.mubr.bf16.mxu0 %v1456
    %1733 = vmatmul.mubr.bf16.gmra.mxu0 %v1455
    %v1734 = vpop.f32.mrf.mxu0
    %v1735 = vadd.f32 %v1498, %v1734
    %v1736 = vpop.f32.mrf.mxu0
    %v1737 = vpop.f32.mrf.mxu0
    %v1738 = vadd.f32 %v1498, %v1737
    %v1739 = vpop.f32.mrf.mxu0
    %1740 = vmatprep.mubr.bf16.mxu0 %v1458
    %1741 = vmatmul.mubr.bf16.gmra.mxu0 %v1457
    %v1742 = vpop.f32.mrf.mxu0
    %v1743 = vadd.f32 %v1498, %v1742
    %v1744 = vpop.f32.mrf.mxu0
    %v1745 = vpop.f32.mrf.mxu0
    %v1746 = vadd.f32 %v1498, %v1745
    %v1747 = vpop.f32.mrf.mxu0
    %1748 = vmatprep.mubr.bf16.mxu0 %v1460
    %1749 = vmatmul.mubr.bf16.gmra.mxu0 %v1459
    %v1750 = vpop.f32.mrf.mxu0
    %v1751 = vadd.f32 %v1498, %v1750
    %v1752 = vpop.f32.mrf.mxu0
    %v1753 = vpop.f32.mrf.mxu0
    %v1754 = vadd.f32 %v1498, %v1753
    %v1755 = vpop.f32.mrf.mxu0
    %1756 = vdwg.mxu0
    %vm1757 = vcmp.ge.f32.partialorder %v1631, 0.0
    %vm1758 = vcmp.ge.f32.partialorder %v1634, 0.0
    %vm1759 = vcmp.ge.f32.partialorder %v1639, 0.0
    %vm1760 = vcmp.ge.f32.partialorder %v1642, 0.0
    %vm1761 = vcmp.ge.f32.partialorder %v1647, 0.0
    %vm1762 = vcmp.ge.f32.partialorder %v1650, 0.0
    %vm1763 = vcmp.ge.f32.partialorder %v1655, 0.0
    %vm1764 = vcmp.ge.f32.partialorder %v1658, 0.0
    %vm1765 = vcmp.ge.f32.partialorder %v1663, 0.0
    %vm1766 = vcmp.ge.f32.partialorder %v1666, 0.0
    %vm1767 = vcmp.ge.f32.partialorder %v1671, 0.0
    %vm1768 = vcmp.ge.f32.partialorder %v1674, 0.0
    %vm1769 = vcmp.ge.f32.partialorder %v1679, 0.0
    %vm1770 = vcmp.ge.f32.partialorder %v1682, 0.0
    %vm1771 = vcmp.ge.f32.partialorder %v1687, 0.0
    %vm1772 = vcmp.ge.f32.partialorder %v1690, 0.0
    %vm1773 = vcmp.ge.f32.partialorder %v1695, 0.0
    %vm1774 = vcmp.ge.f32.partialorder %v1698, 0.0
    %vm1775 = vcmp.ge.f32.partialorder %v1703, 0.0
    %vm1776 = vcmp.ge.f32.partialorder %v1706, 0.0
    %vm1777 = vcmp.ge.f32.partialorder %v1711, 0.0
    %vm1778 = vcmp.ge.f32.partialorder %v1714, 0.0
    %vm1779 = vcmp.ge.f32.partialorder %v1719, 0.0
    %vm1780 = vcmp.ge.f32.partialorder %v1722, 0.0
    %vm1781 = vcmp.ge.f32.partialorder %v1727, 0.0
    %vm1782 = vcmp.ge.f32.partialorder %v1730, 0.0
    %vm1783 = vcmp.ge.f32.partialorder %v1735, 0.0
    %vm1784 = vcmp.ge.f32.partialorder %v1738, 0.0
    %vm1785 = vcmp.ge.f32.partialorder %v1743, 0.0
    %vm1786 = vcmp.ge.f32.partialorder %v1746, 0.0
    %vm1787 = vcmp.ge.f32.partialorder %v1751, 0.0
    %vm1788 = vcmp.ge.f32.partialorder %v1754, 0.0
    %v1789 = vmul.f32 %v1631, 0.2
    %v1790 = vmul.f32 %v1634, 0.2
    %v1791 = vmul.f32 %v1639, 0.2
    %v1792 = vmul.f32 %v1642, 0.2
    %v1793 = vmul.f32 %v1647, 0.2
    %v1794 = vmul.f32 %v1650, 0.2
    %v1795 = vmul.f32 %v1655, 0.2
    %v1796 = vmul.f32 %v1658, 0.2
    %v1797 = vmul.f32 %v1663, 0.2
    %v1798 = vmul.f32 %v1666, 0.2
    %v1799 = vmul.f32 %v1671, 0.2
    %v1800 = vmul.f32 %v1674, 0.2
    %v1801 = vmul.f32 %v1679, 0.2
    %v1802 = vmul.f32 %v1682, 0.2
    %v1803 = vmul.f32 %v1687, 0.2
    %v1804 = vmul.f32 %v1690, 0.2
    %v1805 = vmul.f32 %v1695, 0.2
    %v1806 = vmul.f32 %v1698, 0.2
    %v1807 = vmul.f32 %v1703, 0.2
    %v1808 = vmul.f32 %v1706, 0.2
    %v1809 = vmul.f32 %v1711, 0.2
    %v1810 = vmul.f32 %v1714, 0.2
    %v1811 = vmul.f32 %v1719, 0.2
    %v1812 = vmul.f32 %v1722, 0.2
    %v1813 = vmul.f32 %v1727, 0.2
    %v1814 = vmul.f32 %v1730, 0.2
    %v1815 = vmul.f32 %v1735, 0.2
    %v1816 = vmul.f32 %v1738, 0.2
    %v1817 = vmul.f32 %v1743, 0.2
    %v1818 = vmul.f32 %v1746, 0.2
    %v1819 = vmul.f32 %v1751, 0.2
    %v1820 = vmul.f32 %v1754, 0.2
    %v1821 = vsel %vm1757, %v1631, %v1789
    %v1822 = vsel %vm1758, %v1634, %v1790
    %v1823 = vsel %vm1759, %v1639, %v1791
    %v1824 = vsel %vm1760, %v1642, %v1792
    %v1825 = vsel %vm1761, %v1647, %v1793
    %v1826 = vsel %vm1762, %v1650, %v1794
    %v1827 = vsel %vm1763, %v1655, %v1795
    %v1828 = vsel %vm1764, %v1658, %v1796
    %v1829 = vsel %vm1765, %v1663, %v1797
    %v1830 = vsel %vm1766, %v1666, %v1798
    %v1831 = vsel %vm1767, %v1671, %v1799
    %v1832 = vsel %vm1768, %v1674, %v1800
    %v1833 = vsel %vm1769, %v1679, %v1801
    %v1834 = vsel %vm1770, %v1682, %v1802
    %v1835 = vsel %vm1771, %v1687, %v1803
    %v1836 = vsel %vm1772, %v1690, %v1804
    %v1837 = vsel %vm1773, %v1695, %v1805
    %v1838 = vsel %vm1774, %v1698, %v1806
    %v1839 = vsel %vm1775, %v1703, %v1807
    %v1840 = vsel %vm1776, %v1706, %v1808
    %v1841 = vsel %vm1777, %v1711, %v1809
    %v1842 = vsel %vm1778, %v1714, %v1810
    %v1843 = vsel %vm1779, %v1719, %v1811
    %v1844 = vsel %vm1780, %v1722, %v1812
    %v1845 = vsel %vm1781, %v1727, %v1813
    %v1846 = vsel %vm1782, %v1730, %v1814
    %v1847 = vsel %vm1783, %v1735, %v1815
    %v1848 = vsel %vm1784, %v1738, %v1816
    %v1849 = vsel %vm1785, %v1743, %v1817
    %v1850 = vsel %vm1786, %v1746, %v1818
    %v1851 = vsel %vm1787, %v1751, %v1819
    %v1852 = vsel %vm1788, %v1754, %v1820
    %v1853 = vld [vmem:[%s5] sm:$0x1]
    %v1854 = vld [vmem:[#allocation2] sm:$0x1]
    %1856 = vset.pattern.permute.xlu0 0
    %1857 = vperm.xlu0 %1856, %v1854
    %v1858 = vpop.permute.xlu0 %1857
    %v1860 = vlaneseq
    %v1861 = vshrl.u32 %v1860, 7
    %v1862 = vsub.s32 0, %v1861
    %v1863 = vrot.slane %v1858, %v1862
    %1864 = vmatprep.subr.mxu0 0.0
    %1865 = vmatpush1.xpose.msra.mxu0 %v1836
    %1866 = vmatprep.subr.mxu0 0.0
    %1867 = vmatpush1.xpose.msra.mxu0 %v1835
    %1868 = vmatprep.subr.mxu0 0.0
    %1869 = vmatpush1.xpose.msra.mxu0 %v1834
    %1870 = vmatprep.subr.mxu0 0.0
    %1871 = vmatpush1.xpose.msra.mxu0 %v1833
    %1872 = vmatprep.subr.mxu0 0.0
    %1873 = vmatpush1.xpose.msra.mxu0 %v1832
    %1874 = vmatprep.subr.mxu0 0.0
    %1875 = vmatpush1.xpose.msra.mxu0 %v1831
    %1876 = vmatprep.subr.mxu0 0.0
    %1877 = vmatpush1.xpose.msra.mxu0 %v1830
    %1878 = vmatprep.subr.mxu0 0.0
    %1879 = vmatpush1.xpose.msra.mxu0 %v1829
    %1880 = vmatprep.subr.mxu0 0.0
    %1881 = vmatpush1.xpose.msra.mxu0 %v1828
    %1882 = vmatprep.subr.mxu0 0.0
    %1883 = vmatpush1.xpose.msra.mxu0 %v1827
    %1884 = vmatprep.subr.mxu0 0.0
    %1885 = vmatpush1.xpose.msra.mxu0 %v1826
    %1886 = vmatprep.subr.mxu0 0.0
    %1887 = vmatpush1.xpose.msra.mxu0 %v1825
    %1888 = vmatprep.subr.mxu0 0.0
    %1889 = vmatpush1.xpose.msra.mxu0 %v1824
    %1890 = vmatprep.subr.mxu0 0.0
    %1891 = vmatpush1.xpose.msra.mxu0 %v1823
    %1892 = vmatprep.subr.mxu0 0.0
    %1893 = vmatpush1.xpose.msra.mxu0 %v1822
    %1894 = vmatprep.subr.mxu0 0.0
    %1895 = vmatpush1.xpose.msra.mxu0 %v1821
    %1896 = vmatprep.subr.mxu0 0.0
    %1897 = vmatpush2.xpose.msra.mxu0 %v1852
    %1898 = vmatprep.subr.mxu0 0.0
    %1899 = vmatpush2.xpose.msra.mxu0 %v1851
    %1900 = vmatprep.subr.mxu0 0.0
    %1901 = vmatpush2.xpose.msra.mxu0 %v1850
    %1902 = vmatprep.subr.mxu0 0.0
    %1903 = vmatpush2.xpose.msra.mxu0 %v1849
    %1904 = vmatprep.subr.mxu0 0.0
    %1905 = vmatpush2.xpose.msra.mxu0 %v1848
    %1906 = vmatprep.subr.mxu0 0.0
    %1907 = vmatpush2.xpose.msra.mxu0 %v1847
    %1908 = vmatprep.subr.mxu0 0.0
    %1909 = vmatpush2.xpose.msra.mxu0 %v1846
    %1910 = vmatprep.subr.mxu0 0.0
    %1911 = vmatpush2.xpose.msra.mxu0 %v1845
    %1912 = vmatprep.subr.mxu0 0.0
    %1913 = vmatpush2.xpose.msra.mxu0 %v1844
    %1914 = vmatprep.subr.mxu0 0.0
    %1915 = vmatpush2.xpose.msra.mxu0 %v1843
    %1916 = vmatprep.subr.mxu0 0.0
    %1917 = vmatpush2.xpose.msra.mxu0 %v1842
    %1918 = vmatprep.subr.mxu0 0.0
    %1919 = vmatpush2.xpose.msra.mxu0 %v1841
    %1920 = vmatprep.subr.mxu0 0.0
    %1921 = vmatpush2.xpose.msra.mxu0 %v1840
    %1922 = vmatprep.subr.mxu0 0.0
    %1923 = vmatpush2.xpose.msra.mxu0 %v1839
    %1924 = vmatprep.subr.mxu0 0.0
    %1925 = vmatpush2.xpose.msra.mxu0 %v1838
    %1926 = vmatprep.subr.mxu0 0.0
    %1927 = vmatpush2.xpose.msra.mxu0 %v1837
    %1928 = vmatprep.mubr.f32.mxu0 0.0
    %1929 = vmatmul.mubr.f32.gmra.mxu0 %v1853
    %v1930 = vpop.f32.mrf.mxu0
    %v1931 = vadd.f32 %v1863, %v1930
    %v1932 = vpop.f32.mrf.mxu0
    %v1933 = vadd.f32 %v1863, %v1932
    %1934 = vdwg.mxu0
    %v1935 = vxor.u32 %v1931, 2147483648
    %v1936 = vxor.u32 %v1933, 2147483648
    %v1937 = vmul.f32 %v1935, 1.442695
    %v1938 = vpow.pop %v1937
    %v1939 = vmul.f32 %v1936, 1.442695
    %v1940 = vpow.pop %v1939
    %v1941 = vadd.f32 %v1938, 1.0
    %v1942 = vadd.f32 %v1940, 1.0
    %v1943 = vrcp.pop %v1941
    %v1944 = vmul.f32 1.0, %v1943
    %v1945 = vrcp.pop %v1942
    %v1946 = vmul.f32 1.0, %v1945
    %v1949 = vcombine.low %v1944, %v1946
    %v1951 = vunpack.c.l.s4 1966171168
    %v1952 = vunpack.c.0.s8 %v1951
    %v1953 = vlaneseq
    %v1954 = vshrl.u32 %v1953, 7
    %v1955 = vsub.s32 %v1952, %v1954
    %v1956 = vrot.slane %v1949, %v1955
    %v1958 = vunpack.c.l.s4 1966171168
    %v1959 = vunpack.c.0.s8 %v1958
    %v1960 = vlaneseq
    %v1961 = vshrl.u32 %v1960, 7
    %v1962 = vsub.s32 %v1959, %v1961
    %v1963 = vrot.slane %v1956, %v1962
    %v1965 = vlaneseq
    %vm1966 = vcmp.ge.s32.totalorder %v1965, 0
    %vm1967 = vcmp.lt.s32.totalorder %v1965, 256
    %vm1968 = vmand %vm1966, %vm1967
    %1969 = vst.msk [vmem:[#allocation9] sm:$0x3] %vm1968, %v1963
    // Predicated region
    $region42: #{tpu_custom_call.1} parent=1 // pred_check
      _
    $region43: #{tpu_custom_call.1} parent=1 // pred_check_branch
      %1971 = sbr.rel (0) target = $region45
    $region44: #{tpu_custom_call.1} parent=1 // pred_region
      %s1973 = ssub.s32 32, 32
      %1974 = vsyncadd [#allocation5], %s1973
      %s1976 = sshll.u32 [#allocation9], 4
      %s1977 = int_to_ptr.vmem [resolvable:$true] %s1976
      %1979 = dma.vmem_to_hbm [thread:$0]  %s1977, 32, %s7, [#allocation5]
    $region45: #{tpu_custom_call.1} parent=1 // pred_fallthru
      _
    // Predicated region
    $region46: #{tpu_custom_call.1} parent=1 // pred_check
      _
    $region47: #{tpu_custom_call.1} parent=1 // pred_check_branch
      %1981 = sbr.rel (0) target = $region49
    $region48: #{tpu_custom_call.1} parent=1 // pred_region
      %1982 = dma.done [#allocation5], 32
    $region49: #{tpu_custom_call.1} parent=1 // pred_fallthru
      _
    %1983 = vsyncpa [#allocation4], 1
    %1984 = vsyncpa [#allocation7], 1
    %1985 = vsyncpa [#allocation5], 1

</llo_original>
